<compile_context>
chip_gen: v7x
topology: tpu7x:2x2x1
jax: 0.10.0
libtpu: 0.0.40
codegen_flags: <defaults>
</compile_context>

<pallas_src>
import jax
import jax.numpy as jnp
from jax.experimental import pallas as pl
from jax.experimental.pallas import tpu as pltpu


def _round_up(a, b):
    return ((a + b - 1) // b) * b


def mlp_large_kernel(x_ref, w1_ref, b1_ref, w2_ref, b2_ref,
                     w3_ref, b3_ref, w4t_ref, b4t_ref, o_ref):
    # Layer 1 (normalization folded in), kept in f32 for precision; K=n_in is tiny.
    h = jnp.dot(x_ref[...], w1_ref[...], preferred_element_type=jnp.float32)
    h = jnp.maximum(h + b1_ref[...], 0.0).astype(jnp.bfloat16)

    # Layer 2: (TB, 256) @ (256, 1024), bf16 MXU inputs, f32 accumulation.
    h = jnp.dot(h, w2_ref[...], preferred_element_type=jnp.float32)
    h = jnp.maximum(h + b2_ref[...], 0.0).astype(jnp.bfloat16)

    # Layer 3: (TB, 1024) @ (1024, 256)
    h = jnp.dot(h, w3_ref[...], preferred_element_type=jnp.float32)
    h = jnp.maximum(h + b3_ref[...], 0.0).astype(jnp.bfloat16)

    # Layer 4, transposed for a lane-dense store:
    #   (n_out, 256) contracted with (TB, 256) on the 256-axis -> (n_out, TB).
    o = jax.lax.dot_general(
        w4t_ref[...], h,
        dimension_numbers=(((1,), (1,)), ((), ())),
        preferred_element_type=jnp.float32)
    out_tile = (o + b4t_ref[...]).astype(o_ref.dtype)     # (n_out, TB)
    o_ref[...] = out_tile[None, :, :]                     # (1, n_out, TB)


def prep_params(params, compute_dtype=jnp.bfloat16):
    """Fold normalization into layer 1, zero-pad hidden dims to multiples of 128,
    cast layers 2-4 weights to bf16 (layer 1 stays f32), pre-transpose layer 4."""
    inv_std = 1.0 / params["std"]                                   # (1, n_in)
    w1 = params["w1"] * inv_std.T                                   # diag(1/std) @ W1
    b1 = params["b1"] - (params["mean"] * inv_std) @ params["w1"]

    n_in = params["w1"].shape[0]
    h1 = _round_up(params["w1"].shape[1], 128)   # 200  -> 256
    h2 = _round_up(params["w2"].shape[1], 128)   # 1000 -> 1024
    h3 = _round_up(params["w3"].shape[1], 128)   # 200  -> 256
    n_out = params["w4"].shape[1]

    def pad2(a, rows, cols):
        return jnp.pad(a, ((0, rows - a.shape[0]), (0, cols - a.shape[1])))

    w4t = jnp.transpose(pad2(params["w4"], h3, n_out))              # (n_out, 256)
    b4t = jnp.transpose(params["b4"])                               # (n_out, 1)
    return {
        "w1": pad2(w1, n_in, h1).astype(jnp.float32),               # layer 1 in f32
        "b1": pad2(b1, 1, h1).astype(jnp.float32),
        "w2": pad2(params["w2"], h1, h2).astype(compute_dtype),
        "b2": pad2(params["b2"], 1, h2).astype(jnp.float32),
        "w3": pad2(params["w3"], h2, h3).astype(compute_dtype),
        "b3": pad2(params["b3"], 1, h3).astype(jnp.float32),
        "w4t": w4t.astype(compute_dtype),
        "b4t": b4t.astype(jnp.float32),
    }


def _device_tuned_defaults():
    """(tb_max, vmem_limit_bytes) tuned per TPU generation; safe fallback otherwise."""
    try:
        vmem_cap = pltpu.get_tpu_info().vmem_capacity_bytes
    except Exception:
        vmem_cap = 64 * 1024 * 1024
    if vmem_cap <= 64 * 1024 * 1024:
        # v7x-class (64 MiB / TC): keep tiles moderate and leave scratch headroom.
        return 2048, 48 * 1024 * 1024
    # v5e / v6e (128 MiB): larger tiles amortize the ~0.35 us per-step overhead.
    return 4096, 96 * 1024 * 1024


def _choose_tb(B, tb_max):
    if B <= 512:
        return B                         # single tile; block == full dim is legal
    # >= 2 grid steps so the "parallel" batch axis actually splits across 2 TCs (v7x).
    return min(B, min(tb_max, _round_up(pl.cdiv(B, 2), 256)))


def mlp_large_forward(x, prepped, *, tb_max=None, vmem_limit_bytes=None):
    """x: (B, n_in) f32.  prepped: output of prep_params.  Returns (B, n_out) f32."""
    B, n_in = x.shape
    n_out = prepped["w4t"].shape[0]

    d_tb, d_vmem = _device_tuned_defaults()
    tb_max = d_tb if tb_max is None else tb_max
    vmem_limit_bytes = d_vmem if vmem_limit_bytes is None else vmem_limit_bytes

    TB = _choose_tb(B, tb_max)
    num_tiles = pl.cdiv(B, TB)

    # x / out march along the batch axis; params stay resident (constant index_map).
    x_spec = pl.BlockSpec((TB, n_in), lambda i: (i, 0))
    o_spec = pl.BlockSpec((1, n_out, TB), lambda i: (i, 0, 0))

    param_names = ("w1", "b1", "w2", "b2", "w3", "b3", "w4t", "b4t")
    param_args = [prepped[name] for name in param_names]
    param_specs = [pl.BlockSpec(a.shape, lambda i: (0, 0)) for a in param_args]

    flops = 2 * B * (prepped["w1"].shape[0] * prepped["w1"].shape[1]
                     + prepped["w2"].shape[0] * prepped["w2"].shape[1]
                     + prepped["w3"].shape[0] * prepped["w3"].shape[1]
                     + prepped["w4t"].shape[0] * prepped["w4t"].shape[1])
    bytes_accessed = (x.size * x.dtype.itemsize + B * n_out * 4
                      + sum(a.size * a.dtype.itemsize for a in param_args))
    cost = pl.CostEstimate(flops=flops, transcendentals=0,
                           bytes_accessed=bytes_accessed)

    out = pl.pallas_call(
        mlp_large_kernel,
        out_shape=jax.ShapeDtypeStruct((num_tiles, n_out, TB), jnp.float32),
        grid=(num_tiles,),
        in_specs=[x_spec] + param_specs,
        out_specs=o_spec,
        compiler_params=pltpu.CompilerParams(
            dimension_semantics=("parallel",),
            vmem_limit_bytes=vmem_limit_bytes,
        ),
        cost_estimate=cost,
    )(x, *param_args)

    # (num_tiles, n_out, TB) -> (B, n_out); Flatten of (B, n_out) is a no-op.
    out = jnp.transpose(out, (0, 2, 1)).reshape(num_tiles * TB, n_out)
    return out[:B]


def init_params(key, n_in, n_out=1):
    """Deterministic synthetic parameters matching MLP_Large's __init__ shapes (f32)."""
    dims = [(n_in, 200), (200, 1000), (1000, 200), (200, n_out)]
    keys = jax.random.split(key, 2 * len(dims) + 2)
    params = {}
    for i, (fan_in, fan_out) in enumerate(dims):
        bound = 1.0 / jnp.sqrt(fan_in)  # PyTorch nn.Linear default init range
        params[f"w{i+1}"] = jax.random.uniform(
            keys[2 * i], (fan_in, fan_out), jnp.float32, -bound, bound)
        params[f"b{i+1}"] = jax.random.uniform(
            keys[2 * i + 1], (1, fan_out), jnp.float32, -bound, bound)
    # data_train_mean / data_train_std, viewed as (-1, n_in) -> (1, n_in)
    params["mean"] = jax.random.normal(keys[-2], (1, n_in), jnp.float32)
    params["std"] = jax.random.uniform(keys[-1], (1, n_in), jnp.float32, 0.5, 1.5)
    return params


def reference_forward(x, p):
    """Pure-JAX f32 reference matching the original PyTorch module exactly."""
    h = (x - p["mean"]) / p["std"]
    h = jnp.maximum(h @ p["w1"] + p["b1"], 0.0)
    h = jnp.maximum(h @ p["w2"] + p["b2"], 0.0)
    h = jnp.maximum(h @ p["w3"] + p["b3"], 0.0)
    return h @ p["w4"] + p["b4"]


if __name__ == "__main__":
    B, n_in, n_out = 8, 32, 1   # small test shapes; perf wins appear at B >= 4K
    key = jax.random.PRNGKey(0)
    kx, kp = jax.random.split(key)
    x = jax.random.normal(kx, (B, n_in), jnp.float32)
    params = init_params(kp, n_in, n_out)
    prepped = prep_params(params)

    out = jax.block_until_ready(mlp_large_forward(x, prepped))

    ref = reference_forward(x, params)
    assert out.shape == (B, n_out)
    # Layers 2-4 use bf16 matmul inputs (f32 accumulation) => looser tolerance.
    assert jnp.allclose(out, ref, atol=5e-2, rtol=5e-2), \
        f"max abs err {jnp.max(jnp.abs(out - ref))}"
    print("KERNEL_OK")
</pallas_src>

<mosaic_0001>
module attributes {stable_mosaic.version = 11 : i64} {
  func.func @mlp_large_kernel(%arg0: i32, %arg1: memref<8x32xf32, #tpu.memory_space<vmem>>, %arg2: memref<32x256xf32, #tpu.memory_space<vmem>>, %arg3: memref<1x256xf32, #tpu.memory_space<vmem>>, %arg4: memref<256x1024xbf16, #tpu.memory_space<vmem>>, %arg5: memref<1x1024xf32, #tpu.memory_space<vmem>>, %arg6: memref<1024x256xbf16, #tpu.memory_space<vmem>>, %arg7: memref<1x256xf32, #tpu.memory_space<vmem>>, %arg8: memref<1x256xbf16, #tpu.memory_space<vmem>>, %arg9: memref<1x1xf32, #tpu.memory_space<vmem>>, %arg10: memref<1x1x8xf32, #tpu.memory_space<vmem>>) attributes {dimension_semantics = [#tpu.dimension_semantics<parallel>], iteration_bounds = array<i64: 1>, scalar_prefetch = 0 : i64, scratch_operands = 0 : i64, tpu.core_type = #tpu.core_type<tc>, window_params = [{transform_indices = @transform_0, window_bounds = array<i64: 8, 32>}, {pipeline_mode = #tpu.pipeline_mode<synchronous>, transform_indices = @transform_1, window_bounds = array<i64: 32, 256>}, {pipeline_mode = #tpu.pipeline_mode<synchronous>, transform_indices = @transform_2, window_bounds = array<i64: 1, 256>}, {pipeline_mode = #tpu.pipeline_mode<synchronous>, transform_indices = @transform_3, window_bounds = array<i64: 256, 1024>}, {pipeline_mode = #tpu.pipeline_mode<synchronous>, transform_indices = @transform_4, window_bounds = array<i64: 1, 1024>}, {pipeline_mode = #tpu.pipeline_mode<synchronous>, transform_indices = @transform_5, window_bounds = array<i64: 1024, 256>}, {pipeline_mode = #tpu.pipeline_mode<synchronous>, transform_indices = @transform_6, window_bounds = array<i64: 1, 256>}, {pipeline_mode = #tpu.pipeline_mode<synchronous>, transform_indices = @transform_7, window_bounds = array<i64: 1, 256>}, {pipeline_mode = #tpu.pipeline_mode<synchronous>, transform_indices = @transform_8, window_bounds = array<i64: 1, 1>}, {transform_indices = @transform_9, window_bounds = array<i64: 1, 1, 8>}]} {
    %c0 = arith.constant 0 : index
    %c0_0 = arith.constant 0 : index
    %0 = vector.load %arg1[%c0, %c0_0] : memref<8x32xf32, #tpu.memory_space<vmem>>, vector<8x32xf32>
    %c0_1 = arith.constant 0 : index
    %c0_2 = arith.constant 0 : index
    %1 = vector.load %arg2[%c0_1, %c0_2] : memref<32x256xf32, #tpu.memory_space<vmem>>, vector<32x256xf32>
    %cst = arith.constant dense<0.000000e+00> : vector<8x256xf32>
    %2 = tpu.matmul %0, %1, %cst {dimension_numbers = #tpu.dot_dimension_numbers<[1], [0], [0], [1], [0, 0, 1, 1], [], []>} : vector<8x32xf32>, vector<32x256xf32>, vector<8x256xf32> -> vector<8x256xf32>
    %c0_3 = arith.constant 0 : index
    %c0_4 = arith.constant 0 : index
    %3 = vector.load %arg3[%c0_3, %c0_4] : memref<1x256xf32, #tpu.memory_space<vmem>>, vector<1x256xf32>
    %4 = vector.broadcast %3 : vector<1x256xf32> to vector<8x256xf32>
    %5 = arith.addf %2, %4 : vector<8x256xf32>
    %cst_5 = arith.constant 0.000000e+00 : f32
    %6 = vector.broadcast %cst_5 : f32 to vector<8x256xf32>
    %7 = arith.maximumf %5, %6 : vector<8x256xf32>
    %8 = arith.truncf %7 : vector<8x256xf32> to vector<8x256xbf16>
    %c0_6 = arith.constant 0 : index
    %c0_7 = arith.constant 0 : index
    %9 = vector.load %arg4[%c0_6, %c0_7] : memref<256x1024xbf16, #tpu.memory_space<vmem>>, vector<256x1024xbf16>
    %cst_8 = arith.constant dense<0.000000e+00> : vector<8x1024xf32>
    %10 = tpu.matmul %8, %9, %cst_8 {dimension_numbers = #tpu.dot_dimension_numbers<[1], [0], [0], [1], [0, 0, 1, 1], [], []>} : vector<8x256xbf16>, vector<256x1024xbf16>, vector<8x1024xf32> -> vector<8x1024xf32>
    %c0_9 = arith.constant 0 : index
    %c0_10 = arith.constant 0 : index
    %11 = vector.load %arg5[%c0_9, %c0_10] : memref<1x1024xf32, #tpu.memory_space<vmem>>, vector<1x1024xf32>
    %12 = vector.broadcast %11 : vector<1x1024xf32> to vector<8x1024xf32>
    %13 = arith.addf %10, %12 : vector<8x1024xf32>
    %cst_11 = arith.constant 0.000000e+00 : f32
    %14 = vector.broadcast %cst_11 : f32 to vector<8x1024xf32>
    %15 = arith.maximumf %13, %14 : vector<8x1024xf32>
    %16 = arith.truncf %15 : vector<8x1024xf32> to vector<8x1024xbf16>
    %c0_12 = arith.constant 0 : index
    %c0_13 = arith.constant 0 : index
    %17 = vector.load %arg6[%c0_12, %c0_13] : memref<1024x256xbf16, #tpu.memory_space<vmem>>, vector<1024x256xbf16>
    %cst_14 = arith.constant dense<0.000000e+00> : vector<8x256xf32>
    %18 = tpu.matmul %16, %17, %cst_14 {dimension_numbers = #tpu.dot_dimension_numbers<[1], [0], [0], [1], [0, 0, 1, 1], [], []>} : vector<8x1024xbf16>, vector<1024x256xbf16>, vector<8x256xf32> -> vector<8x256xf32>
    %c0_15 = arith.constant 0 : index
    %c0_16 = arith.constant 0 : index
    %19 = vector.load %arg7[%c0_15, %c0_16] : memref<1x256xf32, #tpu.memory_space<vmem>>, vector<1x256xf32>
    %20 = vector.broadcast %19 : vector<1x256xf32> to vector<8x256xf32>
    %21 = arith.addf %18, %20 : vector<8x256xf32>
    %cst_17 = arith.constant 0.000000e+00 : f32
    %22 = vector.broadcast %cst_17 : f32 to vector<8x256xf32>
    %23 = arith.maximumf %21, %22 : vector<8x256xf32>
    %24 = arith.truncf %23 : vector<8x256xf32> to vector<8x256xbf16>
    %c0_18 = arith.constant 0 : index
    %c0_19 = arith.constant 0 : index
    %25 = vector.load %arg8[%c0_18, %c0_19] : memref<1x256xbf16, #tpu.memory_space<vmem>>, vector<1x256xbf16>
    %cst_20 = arith.constant dense<0.000000e+00> : vector<1x8xf32>
    %26 = tpu.matmul %25, %24, %cst_20 {dimension_numbers = #tpu.dot_dimension_numbers<[1], [1], [0], [0], [0, 0, 1, 0], [], []>} : vector<1x256xbf16>, vector<8x256xbf16>, vector<1x8xf32> -> vector<1x8xf32>
    %c0_21 = arith.constant 0 : index
    %c0_22 = arith.constant 0 : index
    %27 = vector.load %arg9[%c0_21, %c0_22] : memref<1x1xf32, #tpu.memory_space<vmem>>, vector<1x1xf32>
    %28 = vector.broadcast %27 : vector<1x1xf32> to vector<1x8xf32>
    %29 = arith.addf %26, %28 : vector<1x8xf32>
    %30 = vector.shape_cast %29 : vector<1x8xf32> to vector<1x1x8xf32>
    %c0_23 = arith.constant 0 : index
    %c0_24 = arith.constant 0 : index
    %c0_25 = arith.constant 0 : index
    %31 = vector.load %arg10[%c0_23, %c0_24, %c0_25] : memref<1x1x8xf32, #tpu.memory_space<vmem>>, vector<1x1x8xf32>
    tpu.vector_store %arg10[%c0_23, %c0_24, %c0_25], %30 {strides = array<i32>} : memref<1x1x8xf32, #tpu.memory_space<vmem>>, vector<1x1x8xf32>,
    return
  }
  func.func @transform_0(%arg0: i32) -> (i32, i32) {
    %c0_i32 = arith.constant 0 : i32
    %c0_i32_0 = arith.constant 0 : i32
    return %arg0, %c0_i32 : i32, i32
  }
  func.func @transform_1(%arg0: i32) -> (i32, i32) {
    %c0_i32 = arith.constant 0 : i32
    %c0_i32_0 = arith.constant 0 : i32
    %c0_i32_1 = arith.constant 0 : i32
    return %c0_i32, %c0_i32_0 : i32, i32
  }
  func.func @transform_2(%arg0: i32) -> (i32, i32) {
    %c0_i32 = arith.constant 0 : i32
    %c0_i32_0 = arith.constant 0 : i32
    %c0_i32_1 = arith.constant 0 : i32
    return %c0_i32, %c0_i32_0 : i32, i32
  }
  func.func @transform_3(%arg0: i32) -> (i32, i32) {
    %c0_i32 = arith.constant 0 : i32
    %c0_i32_0 = arith.constant 0 : i32
    %c0_i32_1 = arith.constant 0 : i32
    return %c0_i32, %c0_i32_0 : i32, i32
  }
  func.func @transform_4(%arg0: i32) -> (i32, i32) {
    %c0_i32 = arith.constant 0 : i32
    %c0_i32_0 = arith.constant 0 : i32
    %c0_i32_1 = arith.constant 0 : i32
    return %c0_i32, %c0_i32_0 : i32, i32
  }
  func.func @transform_5(%arg0: i32) -> (i32, i32) {
    %c0_i32 = arith.constant 0 : i32
    %c0_i32_0 = arith.constant 0 : i32
    %c0_i32_1 = arith.constant 0 : i32
    return %c0_i32, %c0_i32_0 : i32, i32
  }
  func.func @transform_6(%arg0: i32) -> (i32, i32) {
    %c0_i32 = arith.constant 0 : i32
    %c0_i32_0 = arith.constant 0 : i32
    %c0_i32_1 = arith.constant 0 : i32
    return %c0_i32, %c0_i32_0 : i32, i32
  }
  func.func @transform_7(%arg0: i32) -> (i32, i32) {
    %c0_i32 = arith.constant 0 : i32
    %c0_i32_0 = arith.constant 0 : i32
    %c0_i32_1 = arith.constant 0 : i32
    return %c0_i32, %c0_i32_0 : i32, i32
  }
  func.func @transform_8(%arg0: i32) -> (i32, i32) {
    %c0_i32 = arith.constant 0 : i32
    %c0_i32_0 = arith.constant 0 : i32
    %c0_i32_1 = arith.constant 0 : i32
    return %c0_i32, %c0_i32_0 : i32, i32
  }
  func.func @transform_9(%arg0: i32) -> (i32, i32, i32) {
    %c0_i32 = arith.constant 0 : i32
    %c0_i32_0 = arith.constant 0 : i32
    %c0_i32_1 = arith.constant 0 : i32
    return %arg0, %c0_i32, %c0_i32_0 : i32, i32, i32
  }
}

</mosaic_0001>

<llo_original>
// kernel: tpu_custom_call.1
$region0: #{tpu_custom_call.1}
  #allocation0 [shape = 'u32[]', space=smem, size = 0x4, offset = 0x4, fixed_abs, tag = 'smem constant byte address 0x4 - core index']
  #allocation1 [shape = 'u32[144,128]{1,0:T(1,128)}', space=vmem, size = 0x12000, scoped, tag = 'internal scratch']
  #allocation2 [shape = 'f32[1,1]{1,0:T(1,128)S(1)}', space=vmem, size = 0x200, scoped, tag = 'scoped memory for tpu_custom_call.1']
  %s0 = inlined_call_operand.hbm [shape: f32[8,32], index: 0, kind: input, shape index: {}]
  %s1 = inlined_call_operand.hbm [shape: f32[32,256], index: 1, kind: input, shape index: {}]
  %s2 = inlined_call_operand.vmem [shape: f32[1,256], index: 2, kind: input, shape index: {}]
  %s3 = inlined_call_operand.hbm [shape: bf16[256,1024], index: 3, kind: input, shape index: {}]
  %s4 = inlined_call_operand.vmem [shape: f32[1,1024], index: 4, kind: input, shape index: {}]
  %s5 = inlined_call_operand.hbm [shape: bf16[1024,256], index: 5, kind: input, shape index: {}]
  %s6 = inlined_call_operand.vmem [shape: f32[1,256], index: 6, kind: input, shape index: {}]
  %s7 = inlined_call_operand.vmem [shape: bf16[1,256], index: 7, kind: input, shape index: {}]
  %s8 = inlined_call_operand.<no memory space> [shape: f32[1,1], index: 8, kind: input, shape index: {}]
  %s9 = inlined_call_operand.hbm [shape: f32[1,1,8], index: 9, kind: output, shape index: {}]
  %s10 = sld [smem:[#allocation0]]
  $region62: #{tpu_custom_call.1} parent=0
    _
  %s12 = ssub.s32 1, %s10
  %s13 = scalar_select 0, %s12, %s10
  %v14 = vstv %s8
  %15 = vst [vmem:[#allocation2] sm:$0x1] %v14
  $region1: #{tpu_custom_call.1} parent=0
    #allocation3 [shape = 'u8[4096]{0}', space=vmem, size = 0x1000, scoped, tag = 'input window, operand 0, single buffered']
    #allocation4 [shape = 's32[1]{0}', space=sflag, size = 0x4, scoped, tag = 'scoped memory for tpu_custom_call.1']
    #allocation5 [shape = 's32[1]{0}', space=sflag, size = 0x4, scoped, tag = 'scoped memory for tpu_custom_call.1']
    #allocation6 [shape = 'u8[32768]{0}', space=vmem, size = 0x8000, scoped, tag = 'input window, operand 1, single buffered']
    #allocation7 [shape = 's32[1]{0}', space=sflag, size = 0x4, scoped, tag = 'scoped memory for tpu_custom_call.1']
    #allocation8 [shape = 'u8[524288]{0}', space=vmem, size = 0x80000, scoped, tag = 'input window, operand 3, single buffered']
    #allocation9 [shape = 'u8[524288]{0}', space=vmem, size = 0x80000, scoped, tag = 'input window, operand 5, single buffered']
    #allocation10 [shape = 's32[1]{0}', space=sflag, size = 0x4, scoped, tag = 'scoped memory for tpu_custom_call.1']
    #allocation11 [shape = 'u8[512]{0}', space=vmem, size = 0x400, scoped, tag = 'output window, operand 0, single buffered']
    %16 = vsyncpa [#allocation4], 0
    %17 = vsyncpa [#allocation7], 0
    %18 = vsyncpa [#allocation10], 0
    %19 = vsyncpa [#allocation5], 0
    // Predicated region
    $region2: #{tpu_custom_call.1} parent=1 // pred_check
      _
    $region3: #{tpu_custom_call.1} parent=1 // pred_check_branch
      %21 = sbr.rel (0) target = $region5
    $region4: #{tpu_custom_call.1} parent=1 // pred_region
      %s23 = ssub.s32 128, 128
      %24 = vsyncadd [#allocation4], %s23
      %s26 = sshll.u32 [#allocation3], 4
      %s27 = int_to_ptr.vmem [resolvable:$true] %s26
      %29 = dma.hbm_to_vmem [thread:$0]  %s0, 128, %s27, [#allocation4]
    $region5: #{tpu_custom_call.1} parent=1 // pred_fallthru
      _
    // Predicated region
    $region6: #{tpu_custom_call.1} parent=1 // pred_check
      _
    $region7: #{tpu_custom_call.1} parent=1 // pred_check_branch
      %31 = sbr.rel (0) target = $region9
    $region8: #{tpu_custom_call.1} parent=1 // pred_region
      %s33 = ssub.s32 1024, 1024
      %34 = vsyncadd [#allocation7], %s33
      %s35 = sshll.u32 [#allocation6], 4
      %s36 = int_to_ptr.vmem [resolvable:$true] %s35
      %41 = dma.hbm_to_vmem [thread:$0]  %s1, 1024, %s36, [#allocation7], 256, 256, 16
    $region9: #{tpu_custom_call.1} parent=1 // pred_fallthru
      _
    // Predicated region
    $region10: #{tpu_custom_call.1} parent=1 // pred_check
      _
    $region11: #{tpu_custom_call.1} parent=1 // pred_check_branch
      %43 = sbr.rel (0) target = $region13
    $region12: #{tpu_custom_call.1} parent=1 // pred_region
      _
    $region13: #{tpu_custom_call.1} parent=1 // pred_fallthru
      _
    // Predicated region
    $region14: #{tpu_custom_call.1} parent=1 // pred_check
      _
    $region15: #{tpu_custom_call.1} parent=1 // pred_check_branch
      %45 = sbr.rel (0) target = $region17
    $region16: #{tpu_custom_call.1} parent=1 // pred_region
      %s47 = ssub.s32 16384, 16384
      %48 = vsyncadd [#allocation7], %s47
      %s49 = sshll.u32 [#allocation8], 4
      %s50 = int_to_ptr.vmem [resolvable:$true] %s49
      %55 = dma.hbm_to_vmem [thread:$0]  %s3, 16384, %s50, [#allocation7], 512, 512, 32
    $region17: #{tpu_custom_call.1} parent=1 // pred_fallthru
      _
    // Predicated region
    $region18: #{tpu_custom_call.1} parent=1 // pred_check
      _
    $region19: #{tpu_custom_call.1} parent=1 // pred_check_branch
      %57 = sbr.rel (0) target = $region21
    $region20: #{tpu_custom_call.1} parent=1 // pred_region
      _
    $region21: #{tpu_custom_call.1} parent=1 // pred_fallthru
      _
    // Predicated region
    $region22: #{tpu_custom_call.1} parent=1 // pred_check
      _
    $region23: #{tpu_custom_call.1} parent=1 // pred_check_branch
      %59 = sbr.rel (0) target = $region25
    $region24: #{tpu_custom_call.1} parent=1 // pred_region
      %s61 = ssub.s32 16384, 16384
      %62 = vsyncadd [#allocation10], %s61
      %s63 = sshll.u32 [#allocation9], 4
      %s64 = int_to_ptr.vmem [resolvable:$true] %s63
      %69 = dma.hbm_to_vmem [thread:$0]  %s5, 16384, %s64, [#allocation10], 128, 128, 8
    $region25: #{tpu_custom_call.1} parent=1 // pred_fallthru
      _
    // Predicated region
    $region26: #{tpu_custom_call.1} parent=1 // pred_check
      _
    $region27: #{tpu_custom_call.1} parent=1 // pred_check_branch
      %71 = sbr.rel (0) target = $region29
    $region28: #{tpu_custom_call.1} parent=1 // pred_region
      _
    $region29: #{tpu_custom_call.1} parent=1 // pred_fallthru
      _
    // Predicated region
    $region30: #{tpu_custom_call.1} parent=1 // pred_check
      _
    $region31: #{tpu_custom_call.1} parent=1 // pred_check_branch
      %73 = sbr.rel (0) target = $region33
    $region32: #{tpu_custom_call.1} parent=1 // pred_region
      _
    $region33: #{tpu_custom_call.1} parent=1 // pred_fallthru
      _
    // Predicated region
    $region34: #{tpu_custom_call.1} parent=1 // pred_check
      _
    $region35: #{tpu_custom_call.1} parent=1 // pred_check_branch
      %75 = sbr.rel (0) target = $region37
    $region36: #{tpu_custom_call.1} parent=1 // pred_region
      _
    $region37: #{tpu_custom_call.1} parent=1 // pred_fallthru
      _
    // Predicated region
    $region38: #{tpu_custom_call.1} parent=1 // pred_check
      _
    $region39: #{tpu_custom_call.1} parent=1 // pred_check_branch
      %77 = sbr.rel (0) target = $region41
    $region40: #{tpu_custom_call.1} parent=1 // pred_region
      %78 = dma.done [#allocation4], 128
    $region41: #{tpu_custom_call.1} parent=1 // pred_fallthru
      _
    // Predicated region
    $region42: #{tpu_custom_call.1} parent=1 // pred_check
      _
    $region43: #{tpu_custom_call.1} parent=1 // pred_check_branch
      %80 = sbr.rel (0) target = $region45
    $region44: #{tpu_custom_call.1} parent=1 // pred_region
      %81 = dma.done [#allocation7], 1024
    $region45: #{tpu_custom_call.1} parent=1 // pred_fallthru
      _
    // Predicated region
    $region46: #{tpu_custom_call.1} parent=1 // pred_check
      _
    $region47: #{tpu_custom_call.1} parent=1 // pred_check_branch
      %83 = sbr.rel (0) target = $region49
    $region48: #{tpu_custom_call.1} parent=1 // pred_region
      %84 = dma.done [#allocation7], 16384
    $region49: #{tpu_custom_call.1} parent=1 // pred_fallthru
      _
    // Predicated region
    $region50: #{tpu_custom_call.1} parent=1 // pred_check
      _
    $region51: #{tpu_custom_call.1} parent=1 // pred_check_branch
      %86 = sbr.rel (0) target = $region53
    $region52: #{tpu_custom_call.1} parent=1 // pred_region
      %87 = dma.done [#allocation10], 16384
    $region53: #{tpu_custom_call.1} parent=1 // pred_fallthru
      _
    %v89 = vld [vmem:[#allocation3] sm:$0xff]
    %v90 = vld [vmem:[#allocation6] sm:$0xff]
    %v91 = vld [vmem:[#allocation6 + $0x8] sm:$0xff]
    %v92 = vld [vmem:[#allocation6 + $0x10] sm:$0xff]
    %v93 = vld [vmem:[#allocation6 + $0x18] sm:$0xff]
    %v94 = vld [vmem:[#allocation6 + $0x20] sm:$0xff]
    %v95 = vld [vmem:[#allocation6 + $0x28] sm:$0xff]
    %v96 = vld [vmem:[#allocation6 + $0x30] sm:$0xff]
    %v97 = vld [vmem:[#allocation6 + $0x38] sm:$0xff]
    %v98 = vld [vmem:[%s2] sm:$0x3]
    %v100 = vlaneseq
    %v101 = vshrl.u32 %v100, 7
    %v102 = vsub.s32 0, %v101
    %v103 = vrot.slane %v98, %v102
    %v104 = vlaneseq
    %v105 = vshrl.u32 %v104, 7
    %v106 = vsub.s32 1, %v105
    %v107 = vrot.slane %v98, %v106
    %vm110 = vcmask 261120
    %v112 = vsel %vm110, %v89, 0
    %114 = vmatprep.subr.mxu0 %v91
    %115 = vmatpush1.msra.mxu0 %v90
    %116 = vmatprep.subr.mxu0 %v93
    %117 = vmatpush1.msra.mxu0 %v92
    %118 = vmatprep.subr.mxu0 %v95
    %119 = vmatpush1.msra.mxu0 %v94
    %120 = vmatprep.subr.mxu0 %v97
    %121 = vmatpush1.msra.mxu0 %v96
    %122 = vmatprep.subr.mxu0 0.0
    %123 = vmatpush1.msra.mxu0 0.0
    %124 = vmatprep.subr.mxu0 0.0
    %125 = vmatpush1.msra.mxu0 0.0
    %126 = vmatprep.subr.mxu0 0.0
    %127 = vmatpush1.msra.mxu0 0.0
    %128 = vmatprep.subr.mxu0 0.0
    %129 = vmatpush1.msra.mxu0 0.0
    %130 = vmatprep.subr.mxu0 0.0
    %131 = vmatpush1.msra.mxu0 0.0
    %132 = vmatprep.subr.mxu0 0.0
    %133 = vmatpush1.msra.mxu0 0.0
    %134 = vmatprep.subr.mxu0 0.0
    %135 = vmatpush1.msra.mxu0 0.0
    %136 = vmatprep.subr.mxu0 0.0
    %137 = vmatpush1.msra.mxu0 0.0
    %138 = vmatprep.subr.mxu0 0.0
    %139 = vmatpush1.msra.mxu0 0.0
    %140 = vmatprep.subr.mxu0 0.0
    %141 = vmatpush1.msra.mxu0 0.0
    %142 = vmatprep.subr.mxu0 0.0
    %143 = vmatpush1.msra.mxu0 0.0
    %144 = vmatprep.subr.mxu0 0.0
    %145 = vmatpush1.msra.mxu0 0.0
    %146 = vmatprep.subr.mxu0 0.0
    %147 = vmatpush1.msra.mxu0 0.0
    %148 = vmatprep.subr.mxu0 0.0
    %149 = vmatpush1.msra.mxu0 0.0
    %150 = vmatprep.subr.mxu0 0.0
    %151 = vmatpush1.msra.mxu0 0.0
    %152 = vmatprep.subr.mxu0 0.0
    %153 = vmatpush1.msra.mxu0 0.0
    %154 = vmatprep.subr.mxu0 0.0
    %155 = vmatpush1.msra.mxu0 0.0
    %156 = vmatprep.subr.mxu0 0.0
    %157 = vmatpush1.msra.mxu0 0.0
    %158 = vmatprep.subr.mxu0 0.0
    %159 = vmatpush1.msra.mxu0 0.0
    %160 = vmatprep.subr.mxu0 0.0
    %161 = vmatpush1.msra.mxu0 0.0
    %162 = vmatprep.subr.mxu0 0.0
    %163 = vmatpush1.msra.mxu0 0.0
    %164 = vmatprep.subr.mxu0 0.0
    %165 = vmatpush1.msra.mxu0 0.0
    %166 = vmatprep.subr.mxu0 0.0
    %167 = vmatpush1.msra.mxu0 0.0
    %168 = vmatprep.subr.mxu0 0.0
    %169 = vmatpush1.msra.mxu0 0.0
    %170 = vmatprep.subr.mxu0 0.0
    %171 = vmatpush1.msra.mxu0 0.0
    %172 = vmatprep.subr.mxu0 0.0
    %173 = vmatpush1.msra.mxu0 0.0
    %174 = vmatprep.subr.mxu0 0.0
    %175 = vmatpush1.msra.mxu0 0.0
    %176 = vmatprep.subr.mxu0 0.0
    %177 = vmatpush1.msra.mxu0 0.0
    %178 = vmatprep.mubr.f32.mxu0 0.0
    %179 = vmatmul.mubr.f32.gmra.mrb[0].mxu0 %v112
    %v180 = vpop.f32.mrb[0].mxu0
    %v181 = vadd.f32 %v103, %v180
    %v182 = vpop.f32.mrb[0].mxu0
    %v183 = vadd.f32 %v107, %v182
    %184 = vdwg.mxu0
    %v185 = vmax.f32 %v181, 0.0
    %v186 = vmax.f32 %v183, 0.0
    %v187 = vpack.c.bf16 %v185, %v185
    %v188 = vpack.c.bf16 %v186, %v186
    %v189 = vld [vmem:[#allocation8] sm:$0xff]
    %v190 = vld [vmem:[#allocation8 + $0x8] sm:$0xff]
    %v191 = vld [vmem:[#allocation8 + $0x10] sm:$0xff]
    %v192 = vld [vmem:[#allocation8 + $0x18] sm:$0xff]
    %v193 = vld [vmem:[#allocation8 + $0x20] sm:$0xff]
    %v194 = vld [vmem:[#allocation8 + $0x28] sm:$0xff]
    %v195 = vld [vmem:[#allocation8 + $0x30] sm:$0xff]
    %v196 = vld [vmem:[#allocation8 + $0x38] sm:$0xff]
    %v197 = vld [vmem:[#allocation8 + $0x40] sm:$0xff]
    %v198 = vld [vmem:[#allocation8 + $0x48] sm:$0xff]
    %v199 = vld [vmem:[#allocation8 + $0x50] sm:$0xff]
    %v200 = vld [vmem:[#allocation8 + $0x58] sm:$0xff]
    %v201 = vld [vmem:[#allocation8 + $0x60] sm:$0xff]
    %v202 = vld [vmem:[#allocation8 + $0x68] sm:$0xff]
    %v203 = vld [vmem:[#allocation8 + $0x70] sm:$0xff]
    %v204 = vld [vmem:[#allocation8 + $0x78] sm:$0xff]
    %v205 = vld [vmem:[#allocation8 + $0x80] sm:$0xff]
    %v206 = vld [vmem:[#allocation8 + $0x88] sm:$0xff]
    %v207 = vld [vmem:[#allocation8 + $0x90] sm:$0xff]
    %v208 = vld [vmem:[#allocation8 + $0x98] sm:$0xff]
    %v209 = vld [vmem:[#allocation8 + $0xa0] sm:$0xff]
    %v210 = vld [vmem:[#allocation8 + $0xa8] sm:$0xff]
    %v211 = vld [vmem:[#allocation8 + $0xb0] sm:$0xff]
    %v212 = vld [vmem:[#allocation8 + $0xb8] sm:$0xff]
    %v213 = vld [vmem:[#allocation8 + $0xc0] sm:$0xff]
    %v214 = vld [vmem:[#allocation8 + $0xc8] sm:$0xff]
    %v215 = vld [vmem:[#allocation8 + $0xd0] sm:$0xff]
    %v216 = vld [vmem:[#allocation8 + $0xd8] sm:$0xff]
    %v217 = vld [vmem:[#allocation8 + $0xe0] sm:$0xff]
    %v218 = vld [vmem:[#allocation8 + $0xe8] sm:$0xff]
    %v219 = vld [vmem:[#allocation8 + $0xf0] sm:$0xff]
    %v220 = vld [vmem:[#allocation8 + $0xf8] sm:$0xff]
    %v221 = vld [vmem:[#allocation8 + $0x100] sm:$0xff]
    %v222 = vld [vmem:[#allocation8 + $0x108] sm:$0xff]
    %v223 = vld [vmem:[#allocation8 + $0x110] sm:$0xff]
    %v224 = vld [vmem:[#allocation8 + $0x118] sm:$0xff]
    %v225 = vld [vmem:[#allocation8 + $0x120] sm:$0xff]
    %v226 = vld [vmem:[#allocation8 + $0x128] sm:$0xff]
    %v227 = vld [vmem:[#allocation8 + $0x130] sm:$0xff]
    %v228 = vld [vmem:[#allocation8 + $0x138] sm:$0xff]
    %v229 = vld [vmem:[#allocation8 + $0x140] sm:$0xff]
    %v230 = vld [vmem:[#allocation8 + $0x148] sm:$0xff]
    %v231 = vld [vmem:[#allocation8 + $0x150] sm:$0xff]
    %v232 = vld [vmem:[#allocation8 + $0x158] sm:$0xff]
    %v233 = vld [vmem:[#allocation8 + $0x160] sm:$0xff]
    %v234 = vld [vmem:[#allocation8 + $0x168] sm:$0xff]
    %v235 = vld [vmem:[#allocation8 + $0x170] sm:$0xff]
    %v236 = vld [vmem:[#allocation8 + $0x178] sm:$0xff]
    %v237 = vld [vmem:[#allocation8 + $0x180] sm:$0xff]
    %v238 = vld [vmem:[#allocation8 + $0x188] sm:$0xff]
    %v239 = vld [vmem:[#allocation8 + $0x190] sm:$0xff]
    %v240 = vld [vmem:[#allocation8 + $0x198] sm:$0xff]
    %v241 = vld [vmem:[#allocation8 + $0x1a0] sm:$0xff]
    %v242 = vld [vmem:[#allocation8 + $0x1a8] sm:$0xff]
    %v243 = vld [vmem:[#allocation8 + $0x1b0] sm:$0xff]
    %v244 = vld [vmem:[#allocation8 + $0x1b8] sm:$0xff]
    %v245 = vld [vmem:[#allocation8 + $0x1c0] sm:$0xff]
    %v246 = vld [vmem:[#allocation8 + $0x1c8] sm:$0xff]
    %v247 = vld [vmem:[#allocation8 + $0x1d0] sm:$0xff]
    %v248 = vld [vmem:[#allocation8 + $0x1d8] sm:$0xff]
    %v249 = vld [vmem:[#allocation8 + $0x1e0] sm:$0xff]
    %v250 = vld [vmem:[#allocation8 + $0x1e8] sm:$0xff]
    %v251 = vld [vmem:[#allocation8 + $0x1f0] sm:$0xff]
    %v252 = vld [vmem:[#allocation8 + $0x1f8] sm:$0xff]
    %v253 = vld [vmem:[#allocation8 + $0x200] sm:$0xff]
    %v254 = vld [vmem:[#allocation8 + $0x208] sm:$0xff]
    %v255 = vld [vmem:[#allocation8 + $0x210] sm:$0xff]
    %v256 = vld [vmem:[#allocation8 + $0x218] sm:$0xff]
    %v257 = vld [vmem:[#allocation8 + $0x220] sm:$0xff]
    %v258 = vld [vmem:[#allocation8 + $0x228] sm:$0xff]
    %v259 = vld [vmem:[#allocation8 + $0x230] sm:$0xff]
    %v260 = vld [vmem:[#allocation8 + $0x238] sm:$0xff]
    %v261 = vld [vmem:[#allocation8 + $0x240] sm:$0xff]
    %v262 = vld [vmem:[#allocation8 + $0x248] sm:$0xff]
    %v263 = vld [vmem:[#allocation8 + $0x250] sm:$0xff]
    %v264 = vld [vmem:[#allocation8 + $0x258] sm:$0xff]
    %v265 = vld [vmem:[#allocation8 + $0x260] sm:$0xff]
    %v266 = vld [vmem:[#allocation8 + $0x268] sm:$0xff]
    %v267 = vld [vmem:[#allocation8 + $0x270] sm:$0xff]
    %v268 = vld [vmem:[#allocation8 + $0x278] sm:$0xff]
    %v269 = vld [vmem:[#allocation8 + $0x280] sm:$0xff]
    %v270 = vld [vmem:[#allocation8 + $0x288] sm:$0xff]
    %v271 = vld [vmem:[#allocation8 + $0x290] sm:$0xff]
    %v272 = vld [vmem:[#allocation8 + $0x298] sm:$0xff]
    %v273 = vld [vmem:[#allocation8 + $0x2a0] sm:$0xff]
    %v274 = vld [vmem:[#allocation8 + $0x2a8] sm:$0xff]
    %v275 = vld [vmem:[#allocation8 + $0x2b0] sm:$0xff]
    %v276 = vld [vmem:[#allocation8 + $0x2b8] sm:$0xff]
    %v277 = vld [vmem:[#allocation8 + $0x2c0] sm:$0xff]
    %v278 = vld [vmem:[#allocation8 + $0x2c8] sm:$0xff]
    %v279 = vld [vmem:[#allocation8 + $0x2d0] sm:$0xff]
    %v280 = vld [vmem:[#allocation8 + $0x2d8] sm:$0xff]
    %v281 = vld [vmem:[#allocation8 + $0x2e0] sm:$0xff]
    %v282 = vld [vmem:[#allocation8 + $0x2e8] sm:$0xff]
    %v283 = vld [vmem:[#allocation8 + $0x2f0] sm:$0xff]
    %v284 = vld [vmem:[#allocation8 + $0x2f8] sm:$0xff]
    %v285 = vld [vmem:[#allocation8 + $0x300] sm:$0xff]
    %v286 = vld [vmem:[#allocation8 + $0x308] sm:$0xff]
    %v287 = vld [vmem:[#allocation8 + $0x310] sm:$0xff]
    %v288 = vld [vmem:[#allocation8 + $0x318] sm:$0xff]
    %v289 = vld [vmem:[#allocation8 + $0x320] sm:$0xff]
    %v290 = vld [vmem:[#allocation8 + $0x328] sm:$0xff]
    %v291 = vld [vmem:[#allocation8 + $0x330] sm:$0xff]
    %v292 = vld [vmem:[#allocation8 + $0x338] sm:$0xff]
    %v293 = vld [vmem:[#allocation8 + $0x340] sm:$0xff]
    %v294 = vld [vmem:[#allocation8 + $0x348] sm:$0xff]
    %v295 = vld [vmem:[#allocation8 + $0x350] sm:$0xff]
    %v296 = vld [vmem:[#allocation8 + $0x358] sm:$0xff]
    %v297 = vld [vmem:[#allocation8 + $0x360] sm:$0xff]
    %v298 = vld [vmem:[#allocation8 + $0x368] sm:$0xff]
    %v299 = vld [vmem:[#allocation8 + $0x370] sm:$0xff]
    %v300 = vld [vmem:[#allocation8 + $0x378] sm:$0xff]
    %v301 = vld [vmem:[#allocation8 + $0x380] sm:$0xff]
    %v302 = vld [vmem:[#allocation8 + $0x388] sm:$0xff]
    %v303 = vld [vmem:[#allocation8 + $0x390] sm:$0xff]
    %v304 = vld [vmem:[#allocation8 + $0x398] sm:$0xff]
    %v305 = vld [vmem:[#allocation8 + $0x3a0] sm:$0xff]
    %v306 = vld [vmem:[#allocation8 + $0x3a8] sm:$0xff]
    %v307 = vld [vmem:[#allocation8 + $0x3b0] sm:$0xff]
    %v308 = vld [vmem:[#allocation8 + $0x3b8] sm:$0xff]
    %v309 = vld [vmem:[#allocation8 + $0x3c0] sm:$0xff]
    %v310 = vld [vmem:[#allocation8 + $0x3c8] sm:$0xff]
    %v311 = vld [vmem:[#allocation8 + $0x3d0] sm:$0xff]
    %v312 = vld [vmem:[#allocation8 + $0x3d8] sm:$0xff]
    %v313 = vld [vmem:[#allocation8 + $0x3e0] sm:$0xff]
    %v314 = vld [vmem:[#allocation8 + $0x3e8] sm:$0xff]
    %v315 = vld [vmem:[#allocation8 + $0x3f0] sm:$0xff]
    %v316 = vld [vmem:[#allocation8 + $0x3f8] sm:$0xff]
    %v317 = vld [vmem:[%s4] sm:$0xff]
    %v319 = vlaneseq
    %v320 = vshrl.u32 %v319, 7
    %v321 = vsub.s32 0, %v320
    %v322 = vrot.slane %v317, %v321
    %v323 = vlaneseq
    %v324 = vshrl.u32 %v323, 7
    %v325 = vsub.s32 1, %v324
    %v326 = vrot.slane %v317, %v325
    %v327 = vlaneseq
    %v328 = vshrl.u32 %v327, 7
    %v329 = vsub.s32 2, %v328
    %v330 = vrot.slane %v317, %v329
    %v331 = vlaneseq
    %v332 = vshrl.u32 %v331, 7
    %v333 = vsub.s32 3, %v332
    %v334 = vrot.slane %v317, %v333
    %v335 = vlaneseq
    %v336 = vshrl.u32 %v335, 7
    %v337 = vsub.s32 4, %v336
    %v338 = vrot.slane %v317, %v337
    %v339 = vlaneseq
    %v340 = vshrl.u32 %v339, 7
    %v341 = vsub.s32 5, %v340
    %v342 = vrot.slane %v317, %v341
    %v343 = vlaneseq
    %v344 = vshrl.u32 %v343, 7
    %v345 = vsub.s32 6, %v344
    %v346 = vrot.slane %v317, %v345
    %v347 = vlaneseq
    %v348 = vshrl.u32 %v347, 7
    %v349 = vsub.s32 7, %v348
    %v350 = vrot.slane %v317, %v349
    %v487 = vunpack.c.l.b16 %v189
    %v488 = vunpack.c.h.b16 %v189
    %v489 = vunpack.c.l.b16 %v190
    %v490 = vunpack.c.h.b16 %v190
    %v491 = vunpack.c.l.b16 %v191
    %v492 = vunpack.c.h.b16 %v191
    %v493 = vunpack.c.l.b16 %v192
    %v494 = vunpack.c.h.b16 %v192
    %v495 = vunpack.c.l.b16 %v193
    %v496 = vunpack.c.h.b16 %v193
    %v497 = vunpack.c.l.b16 %v194
    %v498 = vunpack.c.h.b16 %v194
    %v499 = vunpack.c.l.b16 %v195
    %v500 = vunpack.c.h.b16 %v195
    %v501 = vunpack.c.l.b16 %v196
    %v502 = vunpack.c.h.b16 %v196
    %v503 = vunpack.c.l.b16 %v197
    %v504 = vunpack.c.h.b16 %v197
    %v505 = vunpack.c.l.b16 %v198
    %v506 = vunpack.c.h.b16 %v198
    %v507 = vunpack.c.l.b16 %v199
    %v508 = vunpack.c.h.b16 %v199
    %v509 = vunpack.c.l.b16 %v200
    %v510 = vunpack.c.h.b16 %v200
    %v511 = vunpack.c.l.b16 %v201
    %v512 = vunpack.c.h.b16 %v201
    %v513 = vunpack.c.l.b16 %v202
    %v514 = vunpack.c.h.b16 %v202
    %v515 = vunpack.c.l.b16 %v203
    %v516 = vunpack.c.h.b16 %v203
    %v517 = vunpack.c.l.b16 %v204
    %v518 = vunpack.c.h.b16 %v204
    %v519 = vunpack.c.l.b16 %v205
    %v520 = vunpack.c.h.b16 %v205
    %v521 = vunpack.c.l.b16 %v206
    %v522 = vunpack.c.h.b16 %v206
    %v523 = vunpack.c.l.b16 %v207
    %v524 = vunpack.c.h.b16 %v207
    %v525 = vunpack.c.l.b16 %v208
    %v526 = vunpack.c.h.b16 %v208
    %v527 = vunpack.c.l.b16 %v209
    %v528 = vunpack.c.h.b16 %v209
    %v529 = vunpack.c.l.b16 %v210
    %v530 = vunpack.c.h.b16 %v210
    %v531 = vunpack.c.l.b16 %v211
    %v532 = vunpack.c.h.b16 %v211
    %v533 = vunpack.c.l.b16 %v212
    %v534 = vunpack.c.h.b16 %v212
    %v535 = vunpack.c.l.b16 %v213
    %v536 = vunpack.c.h.b16 %v213
    %v537 = vunpack.c.l.b16 %v214
    %v538 = vunpack.c.h.b16 %v214
    %v539 = vunpack.c.l.b16 %v215
    %v540 = vunpack.c.h.b16 %v215
    %v541 = vunpack.c.l.b16 %v216
    %v542 = vunpack.c.h.b16 %v216
    %v543 = vunpack.c.l.b16 %v217
    %v544 = vunpack.c.h.b16 %v217
    %v545 = vunpack.c.l.b16 %v218
    %v546 = vunpack.c.h.b16 %v218
    %v547 = vunpack.c.l.b16 %v219
    %v548 = vunpack.c.h.b16 %v219
    %v549 = vunpack.c.l.b16 %v220
    %v550 = vunpack.c.h.b16 %v220
    %v551 = vunpack.c.l.b16 %v221
    %v552 = vunpack.c.h.b16 %v221
    %v553 = vunpack.c.l.b16 %v222
    %v554 = vunpack.c.h.b16 %v222
    %v555 = vunpack.c.l.b16 %v223
    %v556 = vunpack.c.h.b16 %v223
    %v557 = vunpack.c.l.b16 %v224
    %v558 = vunpack.c.h.b16 %v224
    %v559 = vunpack.c.l.b16 %v225
    %v560 = vunpack.c.h.b16 %v225
    %v561 = vunpack.c.l.b16 %v226
    %v562 = vunpack.c.h.b16 %v226
    %v563 = vunpack.c.l.b16 %v227
    %v564 = vunpack.c.h.b16 %v227
    %v565 = vunpack.c.l.b16 %v228
    %v566 = vunpack.c.h.b16 %v228
    %v567 = vunpack.c.l.b16 %v229
    %v568 = vunpack.c.h.b16 %v229
    %v569 = vunpack.c.l.b16 %v230
    %v570 = vunpack.c.h.b16 %v230
    %v571 = vunpack.c.l.b16 %v231
    %v572 = vunpack.c.h.b16 %v231
    %v573 = vunpack.c.l.b16 %v232
    %v574 = vunpack.c.h.b16 %v232
    %v575 = vunpack.c.l.b16 %v233
    %v576 = vunpack.c.h.b16 %v233
    %v577 = vunpack.c.l.b16 %v234
    %v578 = vunpack.c.h.b16 %v234
    %v579 = vunpack.c.l.b16 %v235
    %v580 = vunpack.c.h.b16 %v235
    %v581 = vunpack.c.l.b16 %v236
    %v582 = vunpack.c.h.b16 %v236
    %v583 = vunpack.c.l.b16 %v237
    %v584 = vunpack.c.h.b16 %v237
    %v585 = vunpack.c.l.b16 %v238
    %v586 = vunpack.c.h.b16 %v238
    %v587 = vunpack.c.l.b16 %v239
    %v588 = vunpack.c.h.b16 %v239
    %v589 = vunpack.c.l.b16 %v240
    %v590 = vunpack.c.h.b16 %v240
    %v591 = vunpack.c.l.b16 %v241
    %v592 = vunpack.c.h.b16 %v241
    %v593 = vunpack.c.l.b16 %v242
    %v594 = vunpack.c.h.b16 %v242
    %v595 = vunpack.c.l.b16 %v243
    %v596 = vunpack.c.h.b16 %v243
    %v597 = vunpack.c.l.b16 %v244
    %v598 = vunpack.c.h.b16 %v244
    %v599 = vunpack.c.l.b16 %v245
    %v600 = vunpack.c.h.b16 %v245
    %v601 = vunpack.c.l.b16 %v246
    %v602 = vunpack.c.h.b16 %v246
    %v603 = vunpack.c.l.b16 %v247
    %v604 = vunpack.c.h.b16 %v247
    %v605 = vunpack.c.l.b16 %v248
    %v606 = vunpack.c.h.b16 %v248
    %v607 = vunpack.c.l.b16 %v249
    %v608 = vunpack.c.h.b16 %v249
    %v609 = vunpack.c.l.b16 %v250
    %v610 = vunpack.c.h.b16 %v250
    %v611 = vunpack.c.l.b16 %v251
    %v612 = vunpack.c.h.b16 %v251
    %v613 = vunpack.c.l.b16 %v252
    %v614 = vunpack.c.h.b16 %v252
    %v615 = vunpack.c.l.b16 %v253
    %v616 = vunpack.c.h.b16 %v253
    %v617 = vunpack.c.l.b16 %v254
    %v618 = vunpack.c.h.b16 %v254
    %v619 = vunpack.c.l.b16 %v255
    %v620 = vunpack.c.h.b16 %v255
    %v621 = vunpack.c.l.b16 %v256
    %v622 = vunpack.c.h.b16 %v256
    %v623 = vunpack.c.l.b16 %v257
    %v624 = vunpack.c.h.b16 %v257
    %v625 = vunpack.c.l.b16 %v258
    %v626 = vunpack.c.h.b16 %v258
    %v627 = vunpack.c.l.b16 %v259
    %v628 = vunpack.c.h.b16 %v259
    %v629 = vunpack.c.l.b16 %v260
    %v630 = vunpack.c.h.b16 %v260
    %v631 = vunpack.c.l.b16 %v261
    %v632 = vunpack.c.h.b16 %v261
    %v633 = vunpack.c.l.b16 %v262
    %v634 = vunpack.c.h.b16 %v262
    %v635 = vunpack.c.l.b16 %v263
    %v636 = vunpack.c.h.b16 %v263
    %v637 = vunpack.c.l.b16 %v264
    %v638 = vunpack.c.h.b16 %v264
    %v639 = vunpack.c.l.b16 %v265
    %v640 = vunpack.c.h.b16 %v265
    %v641 = vunpack.c.l.b16 %v266
    %v642 = vunpack.c.h.b16 %v266
    %v643 = vunpack.c.l.b16 %v267
    %v644 = vunpack.c.h.b16 %v267
    %v645 = vunpack.c.l.b16 %v268
    %v646 = vunpack.c.h.b16 %v268
    %v647 = vunpack.c.l.b16 %v269
    %v648 = vunpack.c.h.b16 %v269
    %v649 = vunpack.c.l.b16 %v270
    %v650 = vunpack.c.h.b16 %v270
    %v651 = vunpack.c.l.b16 %v271
    %v652 = vunpack.c.h.b16 %v271
    %v653 = vunpack.c.l.b16 %v272
    %v654 = vunpack.c.h.b16 %v272
    %v655 = vunpack.c.l.b16 %v273
    %v656 = vunpack.c.h.b16 %v273
    %v657 = vunpack.c.l.b16 %v274
    %v658 = vunpack.c.h.b16 %v274
    %v659 = vunpack.c.l.b16 %v275
    %v660 = vunpack.c.h.b16 %v275
    %v661 = vunpack.c.l.b16 %v276
    %v662 = vunpack.c.h.b16 %v276
    %v663 = vunpack.c.l.b16 %v277
    %v664 = vunpack.c.h.b16 %v277
    %v665 = vunpack.c.l.b16 %v278
    %v666 = vunpack.c.h.b16 %v278
    %v667 = vunpack.c.l.b16 %v279
    %v668 = vunpack.c.h.b16 %v279
    %v669 = vunpack.c.l.b16 %v280
    %v670 = vunpack.c.h.b16 %v280
    %v671 = vunpack.c.l.b16 %v281
    %v672 = vunpack.c.h.b16 %v281
    %v673 = vunpack.c.l.b16 %v282
    %v674 = vunpack.c.h.b16 %v282
    %v675 = vunpack.c.l.b16 %v283
    %v676 = vunpack.c.h.b16 %v283
    %v677 = vunpack.c.l.b16 %v284
    %v678 = vunpack.c.h.b16 %v284
    %v679 = vunpack.c.l.b16 %v285
    %v680 = vunpack.c.h.b16 %v285
    %v681 = vunpack.c.l.b16 %v286
    %v682 = vunpack.c.h.b16 %v286
    %v683 = vunpack.c.l.b16 %v287
    %v684 = vunpack.c.h.b16 %v287
    %v685 = vunpack.c.l.b16 %v288
    %v686 = vunpack.c.h.b16 %v288
    %v687 = vunpack.c.l.b16 %v289
    %v688 = vunpack.c.h.b16 %v289
    %v689 = vunpack.c.l.b16 %v290
    %v690 = vunpack.c.h.b16 %v290
    %v691 = vunpack.c.l.b16 %v291
    %v692 = vunpack.c.h.b16 %v291
    %v693 = vunpack.c.l.b16 %v292
    %v694 = vunpack.c.h.b16 %v292
    %v695 = vunpack.c.l.b16 %v293
    %v696 = vunpack.c.h.b16 %v293
    %v697 = vunpack.c.l.b16 %v294
    %v698 = vunpack.c.h.b16 %v294
    %v699 = vunpack.c.l.b16 %v295
    %v700 = vunpack.c.h.b16 %v295
    %v701 = vunpack.c.l.b16 %v296
    %v702 = vunpack.c.h.b16 %v296
    %v703 = vunpack.c.l.b16 %v297
    %v704 = vunpack.c.h.b16 %v297
    %v705 = vunpack.c.l.b16 %v298
    %v706 = vunpack.c.h.b16 %v298
    %v707 = vunpack.c.l.b16 %v299
    %v708 = vunpack.c.h.b16 %v299
    %v709 = vunpack.c.l.b16 %v300
    %v710 = vunpack.c.h.b16 %v300
    %v711 = vunpack.c.l.b16 %v301
    %v712 = vunpack.c.h.b16 %v301
    %v713 = vunpack.c.l.b16 %v302
    %v714 = vunpack.c.h.b16 %v302
    %v715 = vunpack.c.l.b16 %v303
    %v716 = vunpack.c.h.b16 %v303
    %v717 = vunpack.c.l.b16 %v304
    %v718 = vunpack.c.h.b16 %v304
    %v719 = vunpack.c.l.b16 %v305
    %v720 = vunpack.c.h.b16 %v305
    %v721 = vunpack.c.l.b16 %v306
    %v722 = vunpack.c.h.b16 %v306
    %v723 = vunpack.c.l.b16 %v307
    %v724 = vunpack.c.h.b16 %v307
    %v725 = vunpack.c.l.b16 %v308
    %v726 = vunpack.c.h.b16 %v308
    %v727 = vunpack.c.l.b16 %v309
    %v728 = vunpack.c.h.b16 %v309
    %v729 = vunpack.c.l.b16 %v310
    %v730 = vunpack.c.h.b16 %v310
    %v731 = vunpack.c.l.b16 %v311
    %v732 = vunpack.c.h.b16 %v311
    %v733 = vunpack.c.l.b16 %v312
    %v734 = vunpack.c.h.b16 %v312
    %v735 = vunpack.c.l.b16 %v313
    %v736 = vunpack.c.h.b16 %v313
    %v737 = vunpack.c.l.b16 %v314
    %v738 = vunpack.c.h.b16 %v314
    %v739 = vunpack.c.l.b16 %v315
    %v740 = vunpack.c.h.b16 %v315
    %v741 = vunpack.c.l.b16 %v316
    %v742 = vunpack.c.h.b16 %v316
    %v743 = vpack.c.b16 %v495, %v487
    %v744 = vpack.c.b16 %v496, %v488
    %v745 = vpack.c.b16 %v497, %v489
    %v746 = vpack.c.b16 %v498, %v490
    %v747 = vpack.c.b16 %v499, %v491
    %v748 = vpack.c.b16 %v500, %v492
    %v749 = vpack.c.b16 %v501, %v493
    %v750 = vpack.c.b16 %v502, %v494
    %v751 = vpack.c.b16 %v511, %v503
    %v752 = vpack.c.b16 %v512, %v504
    %v753 = vpack.c.b16 %v513, %v505
    %v754 = vpack.c.b16 %v514, %v506
    %v755 = vpack.c.b16 %v515, %v507
    %v756 = vpack.c.b16 %v516, %v508
    %v757 = vpack.c.b16 %v517, %v509
    %v758 = vpack.c.b16 %v518, %v510
    %v759 = vpack.c.b16 %v527, %v519
    %v760 = vpack.c.b16 %v528, %v520
    %v761 = vpack.c.b16 %v529, %v521
    %v762 = vpack.c.b16 %v530, %v522
    %v763 = vpack.c.b16 %v531, %v523
    %v764 = vpack.c.b16 %v532, %v524
    %v765 = vpack.c.b16 %v533, %v525
    %v766 = vpack.c.b16 %v534, %v526
    %v767 = vpack.c.b16 %v543, %v535
    %v768 = vpack.c.b16 %v544, %v536
    %v769 = vpack.c.b16 %v545, %v537
    %v770 = vpack.c.b16 %v546, %v538
    %v771 = vpack.c.b16 %v547, %v539
    %v772 = vpack.c.b16 %v548, %v540
    %v773 = vpack.c.b16 %v549, %v541
    %v774 = vpack.c.b16 %v550, %v542
    %v775 = vpack.c.b16 %v559, %v551
    %v776 = vpack.c.b16 %v560, %v552
    %v777 = vpack.c.b16 %v561, %v553
    %v778 = vpack.c.b16 %v562, %v554
    %v779 = vpack.c.b16 %v563, %v555
    %v780 = vpack.c.b16 %v564, %v556
    %v781 = vpack.c.b16 %v565, %v557
    %v782 = vpack.c.b16 %v566, %v558
    %v783 = vpack.c.b16 %v575, %v567
    %v784 = vpack.c.b16 %v576, %v568
    %v785 = vpack.c.b16 %v577, %v569
    %v786 = vpack.c.b16 %v578, %v570
    %v787 = vpack.c.b16 %v579, %v571
    %v788 = vpack.c.b16 %v580, %v572
    %v789 = vpack.c.b16 %v581, %v573
    %v790 = vpack.c.b16 %v582, %v574
    %v791 = vpack.c.b16 %v591, %v583
    %v792 = vpack.c.b16 %v592, %v584
    %v793 = vpack.c.b16 %v593, %v585
    %v794 = vpack.c.b16 %v594, %v586
    %v795 = vpack.c.b16 %v595, %v587
    %v796 = vpack.c.b16 %v596, %v588
    %v797 = vpack.c.b16 %v597, %v589
    %v798 = vpack.c.b16 %v598, %v590
    %v799 = vpack.c.b16 %v607, %v599
    %v800 = vpack.c.b16 %v608, %v600
    %v801 = vpack.c.b16 %v609, %v601
    %v802 = vpack.c.b16 %v610, %v602
    %v803 = vpack.c.b16 %v611, %v603
    %v804 = vpack.c.b16 %v612, %v604
    %v805 = vpack.c.b16 %v613, %v605
    %v806 = vpack.c.b16 %v614, %v606
    %v807 = vpack.c.b16 %v623, %v615
    %v808 = vpack.c.b16 %v624, %v616
    %v809 = vpack.c.b16 %v625, %v617
    %v810 = vpack.c.b16 %v626, %v618
    %v811 = vpack.c.b16 %v627, %v619
    %v812 = vpack.c.b16 %v628, %v620
    %v813 = vpack.c.b16 %v629, %v621
    %v814 = vpack.c.b16 %v630, %v622
    %v815 = vpack.c.b16 %v639, %v631
    %v816 = vpack.c.b16 %v640, %v632
    %v817 = vpack.c.b16 %v641, %v633
    %v818 = vpack.c.b16 %v642, %v634
    %v819 = vpack.c.b16 %v643, %v635
    %v820 = vpack.c.b16 %v644, %v636
    %v821 = vpack.c.b16 %v645, %v637
    %v822 = vpack.c.b16 %v646, %v638
    %v823 = vpack.c.b16 %v655, %v647
    %v824 = vpack.c.b16 %v656, %v648
    %v825 = vpack.c.b16 %v657, %v649
    %v826 = vpack.c.b16 %v658, %v650
    %v827 = vpack.c.b16 %v659, %v651
    %v828 = vpack.c.b16 %v660, %v652
    %v829 = vpack.c.b16 %v661, %v653
    %v830 = vpack.c.b16 %v662, %v654
    %v831 = vpack.c.b16 %v671, %v663
    %v832 = vpack.c.b16 %v672, %v664
    %v833 = vpack.c.b16 %v673, %v665
    %v834 = vpack.c.b16 %v674, %v666
    %v835 = vpack.c.b16 %v675, %v667
    %v836 = vpack.c.b16 %v676, %v668
    %v837 = vpack.c.b16 %v677, %v669
    %v838 = vpack.c.b16 %v678, %v670
    %v839 = vpack.c.b16 %v687, %v679
    %v840 = vpack.c.b16 %v688, %v680
    %v841 = vpack.c.b16 %v689, %v681
    %v842 = vpack.c.b16 %v690, %v682
    %v843 = vpack.c.b16 %v691, %v683
    %v844 = vpack.c.b16 %v692, %v684
    %v845 = vpack.c.b16 %v693, %v685
    %v846 = vpack.c.b16 %v694, %v686
    %v847 = vpack.c.b16 %v703, %v695
    %v848 = vpack.c.b16 %v704, %v696
    %v849 = vpack.c.b16 %v705, %v697
    %v850 = vpack.c.b16 %v706, %v698
    %v851 = vpack.c.b16 %v707, %v699
    %v852 = vpack.c.b16 %v708, %v700
    %v853 = vpack.c.b16 %v709, %v701
    %v854 = vpack.c.b16 %v710, %v702
    %v855 = vpack.c.b16 %v719, %v711
    %v856 = vpack.c.b16 %v720, %v712
    %v857 = vpack.c.b16 %v721, %v713
    %v858 = vpack.c.b16 %v722, %v714
    %v859 = vpack.c.b16 %v723, %v715
    %v860 = vpack.c.b16 %v724, %v716
    %v861 = vpack.c.b16 %v725, %v717
    %v862 = vpack.c.b16 %v726, %v718
    %v863 = vpack.c.b16 %v735, %v727
    %v864 = vpack.c.b16 %v736, %v728
    %v865 = vpack.c.b16 %v737, %v729
    %v866 = vpack.c.b16 %v738, %v730
    %v867 = vpack.c.b16 %v739, %v731
    %v868 = vpack.c.b16 %v740, %v732
    %v869 = vpack.c.b16 %v741, %v733
    %v870 = vpack.c.b16 %v742, %v734
    %999 = vmatprep.subr.bf16.mxu0 %v744
    %1000 = vmatpush1.bf16.msra.mxu0 %v743
    %1001 = vmatprep.subr.bf16.mxu0 %v752
    %1002 = vmatpush1.bf16.msra.mxu0 %v751
    %1003 = vmatprep.subr.bf16.mxu0 %v760
    %1004 = vmatpush1.bf16.msra.mxu0 %v759
    %1005 = vmatprep.subr.bf16.mxu0 %v768
    %1006 = vmatpush1.bf16.msra.mxu0 %v767
    %1007 = vmatprep.subr.bf16.mxu0 %v776
    %1008 = vmatpush1.bf16.msra.mxu0 %v775
    %1009 = vmatprep.subr.bf16.mxu0 %v784
    %1010 = vmatpush1.bf16.msra.mxu0 %v783
    %1011 = vmatprep.subr.bf16.mxu0 %v792
    %1012 = vmatpush1.bf16.msra.mxu0 %v791
    %1013 = vmatprep.subr.bf16.mxu0 %v800
    %1014 = vmatpush1.bf16.msra.mxu0 %v799
    %1015 = vmatprep.subr.bf16.mxu0 %v808
    %1016 = vmatpush1.bf16.msra.mxu0 %v807
    %1017 = vmatprep.subr.bf16.mxu0 %v816
    %1018 = vmatpush1.bf16.msra.mxu0 %v815
    %1019 = vmatprep.subr.bf16.mxu0 %v824
    %1020 = vmatpush1.bf16.msra.mxu0 %v823
    %1021 = vmatprep.subr.bf16.mxu0 %v832
    %1022 = vmatpush1.bf16.msra.mxu0 %v831
    %1023 = vmatprep.subr.bf16.mxu0 %v840
    %1024 = vmatpush1.bf16.msra.mxu0 %v839
    %1025 = vmatprep.subr.bf16.mxu0 %v848
    %1026 = vmatpush1.bf16.msra.mxu0 %v847
    %1027 = vmatprep.subr.bf16.mxu0 %v856
    %1028 = vmatpush1.bf16.msra.mxu0 %v855
    %1029 = vmatprep.subr.bf16.mxu0 %v864
    %1030 = vmatpush1.bf16.msra.mxu0 %v863
    %1031 = vmatprep.mubr.bf16.mxu0 %v188
    %1032 = vmatmul.mubr.bf16.gmra.mrb[0].mxu0 %v187
    %v1033 = vpop.f32.mrb[0].mxu0
    %v1034 = vadd.f32 %v322, %v1033
    %v1035 = vpop.f32.mrb[0].mxu0
    %v1036 = vadd.f32 %v326, %v1035
    %v1037 = vpop.f32.mrb[0].mxu0
    %v1038 = vpop.f32.mrb[0].mxu0
    %1039 = vdwg.mxu0
    %1040 = vmatprep.subr.bf16.mxu0 %v746
    %1041 = vmatpush1.bf16.msra.mxu0 %v745
    %1042 = vmatprep.subr.bf16.mxu0 %v754
    %1043 = vmatpush1.bf16.msra.mxu0 %v753
    %1044 = vmatprep.subr.bf16.mxu0 %v762
    %1045 = vmatpush1.bf16.msra.mxu0 %v761
    %1046 = vmatprep.subr.bf16.mxu0 %v770
    %1047 = vmatpush1.bf16.msra.mxu0 %v769
    %1048 = vmatprep.subr.bf16.mxu0 %v778
    %1049 = vmatpush1.bf16.msra.mxu0 %v777
    %1050 = vmatprep.subr.bf16.mxu0 %v786
    %1051 = vmatpush1.bf16.msra.mxu0 %v785
    %1052 = vmatprep.subr.bf16.mxu0 %v794
    %1053 = vmatpush1.bf16.msra.mxu0 %v793
    %1054 = vmatprep.subr.bf16.mxu0 %v802
    %1055 = vmatpush1.bf16.msra.mxu0 %v801
    %1056 = vmatprep.subr.bf16.mxu0 %v810
    %1057 = vmatpush1.bf16.msra.mxu0 %v809
    %1058 = vmatprep.subr.bf16.mxu0 %v818
    %1059 = vmatpush1.bf16.msra.mxu0 %v817
    %1060 = vmatprep.subr.bf16.mxu0 %v826
    %1061 = vmatpush1.bf16.msra.mxu0 %v825
    %1062 = vmatprep.subr.bf16.mxu0 %v834
    %1063 = vmatpush1.bf16.msra.mxu0 %v833
    %1064 = vmatprep.subr.bf16.mxu0 %v842
    %1065 = vmatpush1.bf16.msra.mxu0 %v841
    %1066 = vmatprep.subr.bf16.mxu0 %v850
    %1067 = vmatpush1.bf16.msra.mxu0 %v849
    %1068 = vmatprep.subr.bf16.mxu0 %v858
    %1069 = vmatpush1.bf16.msra.mxu0 %v857
    %1070 = vmatprep.subr.bf16.mxu0 %v866
    %1071 = vmatpush1.bf16.msra.mxu0 %v865
    %1072 = vmatprep.mubr.bf16.mxu0 %v188
    %1073 = vmatmul.mubr.bf16.gmra.mrb[0].mxu0 %v187
    %v1074 = vpop.f32.mrb[0].mxu0
    %v1075 = vadd.f32 %v330, %v1074
    %v1076 = vpop.f32.mrb[0].mxu0
    %v1077 = vadd.f32 %v334, %v1076
    %v1078 = vpop.f32.mrb[0].mxu0
    %v1079 = vpop.f32.mrb[0].mxu0
    %1080 = vdwg.mxu0
    %1081 = vmatprep.subr.bf16.mxu0 %v748
    %1082 = vmatpush1.bf16.msra.mxu0 %v747
    %1083 = vmatprep.subr.bf16.mxu0 %v756
    %1084 = vmatpush1.bf16.msra.mxu0 %v755
    %1085 = vmatprep.subr.bf16.mxu0 %v764
    %1086 = vmatpush1.bf16.msra.mxu0 %v763
    %1087 = vmatprep.subr.bf16.mxu0 %v772
    %1088 = vmatpush1.bf16.msra.mxu0 %v771
    %1089 = vmatprep.subr.bf16.mxu0 %v780
    %1090 = vmatpush1.bf16.msra.mxu0 %v779
    %1091 = vmatprep.subr.bf16.mxu0 %v788
    %1092 = vmatpush1.bf16.msra.mxu0 %v787
    %1093 = vmatprep.subr.bf16.mxu0 %v796
    %1094 = vmatpush1.bf16.msra.mxu0 %v795
    %1095 = vmatprep.subr.bf16.mxu0 %v804
    %1096 = vmatpush1.bf16.msra.mxu0 %v803
    %1097 = vmatprep.subr.bf16.mxu0 %v812
    %1098 = vmatpush1.bf16.msra.mxu0 %v811
    %1099 = vmatprep.subr.bf16.mxu0 %v820
    %1100 = vmatpush1.bf16.msra.mxu0 %v819
    %1101 = vmatprep.subr.bf16.mxu0 %v828
    %1102 = vmatpush1.bf16.msra.mxu0 %v827
    %1103 = vmatprep.subr.bf16.mxu0 %v836
    %1104 = vmatpush1.bf16.msra.mxu0 %v835
    %1105 = vmatprep.subr.bf16.mxu0 %v844
    %1106 = vmatpush1.bf16.msra.mxu0 %v843
    %1107 = vmatprep.subr.bf16.mxu0 %v852
    %1108 = vmatpush1.bf16.msra.mxu0 %v851
    %1109 = vmatprep.subr.bf16.mxu0 %v860
    %1110 = vmatpush1.bf16.msra.mxu0 %v859
    %1111 = vmatprep.subr.bf16.mxu0 %v868
    %1112 = vmatpush1.bf16.msra.mxu0 %v867
    %1113 = vmatprep.mubr.bf16.mxu0 %v188
    %1114 = vmatmul.mubr.bf16.gmra.mrb[0].mxu0 %v187
    %v1115 = vpop.f32.mrb[0].mxu0
    %v1116 = vadd.f32 %v338, %v1115
    %v1117 = vpop.f32.mrb[0].mxu0
    %v1118 = vadd.f32 %v342, %v1117
    %v1119 = vpop.f32.mrb[0].mxu0
    %v1120 = vpop.f32.mrb[0].mxu0
    %1121 = vdwg.mxu0
    %1122 = vmatprep.subr.bf16.mxu0 %v750
    %1123 = vmatpush1.bf16.msra.mxu0 %v749
    %1124 = vmatprep.subr.bf16.mxu0 %v758
    %1125 = vmatpush1.bf16.msra.mxu0 %v757
    %1126 = vmatprep.subr.bf16.mxu0 %v766
    %1127 = vmatpush1.bf16.msra.mxu0 %v765
    %1128 = vmatprep.subr.bf16.mxu0 %v774
    %1129 = vmatpush1.bf16.msra.mxu0 %v773
    %1130 = vmatprep.subr.bf16.mxu0 %v782
    %1131 = vmatpush1.bf16.msra.mxu0 %v781
    %1132 = vmatprep.subr.bf16.mxu0 %v790
    %1133 = vmatpush1.bf16.msra.mxu0 %v789
    %1134 = vmatprep.subr.bf16.mxu0 %v798
    %1135 = vmatpush1.bf16.msra.mxu0 %v797
    %1136 = vmatprep.subr.bf16.mxu0 %v806
    %1137 = vmatpush1.bf16.msra.mxu0 %v805
    %1138 = vmatprep.subr.bf16.mxu0 %v814
    %1139 = vmatpush1.bf16.msra.mxu0 %v813
    %1140 = vmatprep.subr.bf16.mxu0 %v822
    %1141 = vmatpush1.bf16.msra.mxu0 %v821
    %1142 = vmatprep.subr.bf16.mxu0 %v830
    %1143 = vmatpush1.bf16.msra.mxu0 %v829
    %1144 = vmatprep.subr.bf16.mxu0 %v838
    %1145 = vmatpush1.bf16.msra.mxu0 %v837
    %1146 = vmatprep.subr.bf16.mxu0 %v846
    %1147 = vmatpush1.bf16.msra.mxu0 %v845
    %1148 = vmatprep.subr.bf16.mxu0 %v854
    %1149 = vmatpush1.bf16.msra.mxu0 %v853
    %1150 = vmatprep.subr.bf16.mxu0 %v862
    %1151 = vmatpush1.bf16.msra.mxu0 %v861
    %1152 = vmatprep.subr.bf16.mxu0 %v870
    %1153 = vmatpush1.bf16.msra.mxu0 %v869
    %1154 = vmatprep.mubr.bf16.mxu0 %v188
    %1155 = vmatmul.mubr.bf16.gmra.mrb[0].mxu0 %v187
    %v1156 = vpop.f32.mrb[0].mxu0
    %v1157 = vadd.f32 %v346, %v1156
    %v1158 = vpop.f32.mrb[0].mxu0
    %v1159 = vadd.f32 %v350, %v1158
    %v1160 = vpop.f32.mrb[0].mxu0
    %v1161 = vpop.f32.mrb[0].mxu0
    %1162 = vdwg.mxu0
    %v1163 = vmax.f32 %v1034, 0.0
    %v1164 = vmax.f32 %v1036, 0.0
    %v1165 = vmax.f32 %v1075, 0.0
    %v1166 = vmax.f32 %v1077, 0.0
    %v1167 = vmax.f32 %v1116, 0.0
    %v1168 = vmax.f32 %v1118, 0.0
    %v1169 = vmax.f32 %v1157, 0.0
    %v1170 = vmax.f32 %v1159, 0.0
    %v1171 = vpack.c.bf16 %v1163, %v1163
    %v1172 = vpack.c.bf16 %v1164, %v1164
    %v1173 = vpack.c.bf16 %v1165, %v1165
    %v1174 = vpack.c.bf16 %v1166, %v1166
    %v1175 = vpack.c.bf16 %v1167, %v1167
    %v1176 = vpack.c.bf16 %v1168, %v1168
    %v1177 = vpack.c.bf16 %v1169, %v1169
    %v1178 = vpack.c.bf16 %v1170, %v1170
    %v1179 = vld [vmem:[#allocation9] sm:$0xff]
    %v1180 = vld [vmem:[#allocation9 + $0x8] sm:$0xff]
    %v1181 = vld [vmem:[#allocation9 + $0x10] sm:$0xff]
    %v1182 = vld [vmem:[#allocation9 + $0x18] sm:$0xff]
    %v1183 = vld [vmem:[#allocation9 + $0x20] sm:$0xff]
    %v1184 = vld [vmem:[#allocation9 + $0x28] sm:$0xff]
    %v1185 = vld [vmem:[#allocation9 + $0x30] sm:$0xff]
    %v1186 = vld [vmem:[#allocation9 + $0x38] sm:$0xff]
    %v1187 = vld [vmem:[#allocation9 + $0x40] sm:$0xff]
    %v1188 = vld [vmem:[#allocation9 + $0x48] sm:$0xff]
    %v1189 = vld [vmem:[#allocation9 + $0x50] sm:$0xff]
    %v1190 = vld [vmem:[#allocation9 + $0x58] sm:$0xff]
    %v1191 = vld [vmem:[#allocation9 + $0x60] sm:$0xff]
    %v1192 = vld [vmem:[#allocation9 + $0x68] sm:$0xff]
    %v1193 = vld [vmem:[#allocation9 + $0x70] sm:$0xff]
    %v1194 = vld [vmem:[#allocation9 + $0x78] sm:$0xff]
    %v1195 = vld [vmem:[#allocation9 + $0x80] sm:$0xff]
    %v1196 = vld [vmem:[#allocation9 + $0x88] sm:$0xff]
    %v1197 = vld [vmem:[#allocation9 + $0x90] sm:$0xff]
    %v1198 = vld [vmem:[#allocation9 + $0x98] sm:$0xff]
    %v1199 = vld [vmem:[#allocation9 + $0xa0] sm:$0xff]
    %v1200 = vld [vmem:[#allocation9 + $0xa8] sm:$0xff]
    %v1201 = vld [vmem:[#allocation9 + $0xb0] sm:$0xff]
    %v1202 = vld [vmem:[#allocation9 + $0xb8] sm:$0xff]
    %v1203 = vld [vmem:[#allocation9 + $0xc0] sm:$0xff]
    %v1204 = vld [vmem:[#allocation9 + $0xc8] sm:$0xff]
    %v1205 = vld [vmem:[#allocation9 + $0xd0] sm:$0xff]
    %v1206 = vld [vmem:[#allocation9 + $0xd8] sm:$0xff]
    %v1207 = vld [vmem:[#allocation9 + $0xe0] sm:$0xff]
    %v1208 = vld [vmem:[#allocation9 + $0xe8] sm:$0xff]
    %v1209 = vld [vmem:[#allocation9 + $0xf0] sm:$0xff]
    %v1210 = vld [vmem:[#allocation9 + $0xf8] sm:$0xff]
    %v1211 = vld [vmem:[#allocation9 + $0x100] sm:$0xff]
    %v1212 = vld [vmem:[#allocation9 + $0x108] sm:$0xff]
    %v1213 = vld [vmem:[#allocation9 + $0x110] sm:$0xff]
    %v1214 = vld [vmem:[#allocation9 + $0x118] sm:$0xff]
    %v1215 = vld [vmem:[#allocation9 + $0x120] sm:$0xff]
    %v1216 = vld [vmem:[#allocation9 + $0x128] sm:$0xff]
    %v1217 = vld [vmem:[#allocation9 + $0x130] sm:$0xff]
    %v1218 = vld [vmem:[#allocation9 + $0x138] sm:$0xff]
    %v1219 = vld [vmem:[#allocation9 + $0x140] sm:$0xff]
    %v1220 = vld [vmem:[#allocation9 + $0x148] sm:$0xff]
    %v1221 = vld [vmem:[#allocation9 + $0x150] sm:$0xff]
    %v1222 = vld [vmem:[#allocation9 + $0x158] sm:$0xff]
    %v1223 = vld [vmem:[#allocation9 + $0x160] sm:$0xff]
    %v1224 = vld [vmem:[#allocation9 + $0x168] sm:$0xff]
    %v1225 = vld [vmem:[#allocation9 + $0x170] sm:$0xff]
    %v1226 = vld [vmem:[#allocation9 + $0x178] sm:$0xff]
    %v1227 = vld [vmem:[#allocation9 + $0x180] sm:$0xff]
    %v1228 = vld [vmem:[#allocation9 + $0x188] sm:$0xff]
    %v1229 = vld [vmem:[#allocation9 + $0x190] sm:$0xff]
    %v1230 = vld [vmem:[#allocation9 + $0x198] sm:$0xff]
    %v1231 = vld [vmem:[#allocation9 + $0x1a0] sm:$0xff]
    %v1232 = vld [vmem:[#allocation9 + $0x1a8] sm:$0xff]
    %v1233 = vld [vmem:[#allocation9 + $0x1b0] sm:$0xff]
    %v1234 = vld [vmem:[#allocation9 + $0x1b8] sm:$0xff]
    %v1235 = vld [vmem:[#allocation9 + $0x1c0] sm:$0xff]
    %v1236 = vld [vmem:[#allocation9 + $0x1c8] sm:$0xff]
    %v1237 = vld [vmem:[#allocation9 + $0x1d0] sm:$0xff]
    %v1238 = vld [vmem:[#allocation9 + $0x1d8] sm:$0xff]
    %v1239 = vld [vmem:[#allocation9 + $0x1e0] sm:$0xff]
    %v1240 = vld [vmem:[#allocation9 + $0x1e8] sm:$0xff]
    %v1241 = vld [vmem:[#allocation9 + $0x1f0] sm:$0xff]
    %v1242 = vld [vmem:[#allocation9 + $0x1f8] sm:$0xff]
    %v1243 = vld [vmem:[#allocation9 + $0x200] sm:$0xff]
    %v1244 = vld [vmem:[#allocation9 + $0x208] sm:$0xff]
    %v1245 = vld [vmem:[#allocation9 + $0x210] sm:$0xff]
    %v1246 = vld [vmem:[#allocation9 + $0x218] sm:$0xff]
    %v1247 = vld [vmem:[#allocation9 + $0x220] sm:$0xff]
    %v1248 = vld [vmem:[#allocation9 + $0x228] sm:$0xff]
    %v1249 = vld [vmem:[#allocation9 + $0x230] sm:$0xff]
    %v1250 = vld [vmem:[#allocation9 + $0x238] sm:$0xff]
    %v1251 = vld [vmem:[#allocation9 + $0x240] sm:$0xff]
    %v1252 = vld [vmem:[#allocation9 + $0x248] sm:$0xff]
    %v1253 = vld [vmem:[#allocation9 + $0x250] sm:$0xff]
    %v1254 = vld [vmem:[#allocation9 + $0x258] sm:$0xff]
    %v1255 = vld [vmem:[#allocation9 + $0x260] sm:$0xff]
    %v1256 = vld [vmem:[#allocation9 + $0x268] sm:$0xff]
    %v1257 = vld [vmem:[#allocation9 + $0x270] sm:$0xff]
    %v1258 = vld [vmem:[#allocation9 + $0x278] sm:$0xff]
    %v1259 = vld [vmem:[#allocation9 + $0x280] sm:$0xff]
    %v1260 = vld [vmem:[#allocation9 + $0x288] sm:$0xff]
    %v1261 = vld [vmem:[#allocation9 + $0x290] sm:$0xff]
    %v1262 = vld [vmem:[#allocation9 + $0x298] sm:$0xff]
    %v1263 = vld [vmem:[#allocation9 + $0x2a0] sm:$0xff]
    %v1264 = vld [vmem:[#allocation9 + $0x2a8] sm:$0xff]
    %v1265 = vld [vmem:[#allocation9 + $0x2b0] sm:$0xff]
    %v1266 = vld [vmem:[#allocation9 + $0x2b8] sm:$0xff]
    %v1267 = vld [vmem:[#allocation9 + $0x2c0] sm:$0xff]
    %v1268 = vld [vmem:[#allocation9 + $0x2c8] sm:$0xff]
    %v1269 = vld [vmem:[#allocation9 + $0x2d0] sm:$0xff]
    %v1270 = vld [vmem:[#allocation9 + $0x2d8] sm:$0xff]
    %v1271 = vld [vmem:[#allocation9 + $0x2e0] sm:$0xff]
    %v1272 = vld [vmem:[#allocation9 + $0x2e8] sm:$0xff]
    %v1273 = vld [vmem:[#allocation9 + $0x2f0] sm:$0xff]
    %v1274 = vld [vmem:[#allocation9 + $0x2f8] sm:$0xff]
    %v1275 = vld [vmem:[#allocation9 + $0x300] sm:$0xff]
    %v1276 = vld [vmem:[#allocation9 + $0x308] sm:$0xff]
    %v1277 = vld [vmem:[#allocation9 + $0x310] sm:$0xff]
    %v1278 = vld [vmem:[#allocation9 + $0x318] sm:$0xff]
    %v1279 = vld [vmem:[#allocation9 + $0x320] sm:$0xff]
    %v1280 = vld [vmem:[#allocation9 + $0x328] sm:$0xff]
    %v1281 = vld [vmem:[#allocation9 + $0x330] sm:$0xff]
    %v1282 = vld [vmem:[#allocation9 + $0x338] sm:$0xff]
    %v1283 = vld [vmem:[#allocation9 + $0x340] sm:$0xff]
    %v1284 = vld [vmem:[#allocation9 + $0x348] sm:$0xff]
    %v1285 = vld [vmem:[#allocation9 + $0x350] sm:$0xff]
    %v1286 = vld [vmem:[#allocation9 + $0x358] sm:$0xff]
    %v1287 = vld [vmem:[#allocation9 + $0x360] sm:$0xff]
    %v1288 = vld [vmem:[#allocation9 + $0x368] sm:$0xff]
    %v1289 = vld [vmem:[#allocation9 + $0x370] sm:$0xff]
    %v1290 = vld [vmem:[#allocation9 + $0x378] sm:$0xff]
    %v1291 = vld [vmem:[#allocation9 + $0x380] sm:$0xff]
    %v1292 = vld [vmem:[#allocation9 + $0x388] sm:$0xff]
    %v1293 = vld [vmem:[#allocation9 + $0x390] sm:$0xff]
    %v1294 = vld [vmem:[#allocation9 + $0x398] sm:$0xff]
    %v1295 = vld [vmem:[#allocation9 + $0x3a0] sm:$0xff]
    %v1296 = vld [vmem:[#allocation9 + $0x3a8] sm:$0xff]
    %v1297 = vld [vmem:[#allocation9 + $0x3b0] sm:$0xff]
    %v1298 = vld [vmem:[#allocation9 + $0x3b8] sm:$0xff]
    %v1299 = vld [vmem:[#allocation9 + $0x3c0] sm:$0xff]
    %v1300 = vld [vmem:[#allocation9 + $0x3c8] sm:$0xff]
    %v1301 = vld [vmem:[#allocation9 + $0x3d0] sm:$0xff]
    %v1302 = vld [vmem:[#allocation9 + $0x3d8] sm:$0xff]
    %v1303 = vld [vmem:[#allocation9 + $0x3e0] sm:$0xff]
    %v1304 = vld [vmem:[#allocation9 + $0x3e8] sm:$0xff]
    %v1305 = vld [vmem:[#allocation9 + $0x3f0] sm:$0xff]
    %v1306 = vld [vmem:[#allocation9 + $0x3f8] sm:$0xff]
    %v1307 = vld [vmem:[%s6] sm:$0x3]
    %v1309 = vlaneseq
    %v1310 = vshrl.u32 %v1309, 7
    %v1311 = vsub.s32 0, %v1310
    %v1312 = vrot.slane %v1307, %v1311
    %v1313 = vlaneseq
    %v1314 = vshrl.u32 %v1313, 7
    %v1315 = vsub.s32 1, %v1314
    %v1316 = vrot.slane %v1307, %v1315
    %v1447 = vunpack.c.l.b16 %v1179
    %v1448 = vunpack.c.h.b16 %v1179
    %v1449 = vunpack.c.l.b16 %v1180
    %v1450 = vunpack.c.h.b16 %v1180
    %v1451 = vunpack.c.l.b16 %v1181
    %v1452 = vunpack.c.h.b16 %v1181
    %v1453 = vunpack.c.l.b16 %v1182
    %v1454 = vunpack.c.h.b16 %v1182
    %v1455 = vunpack.c.l.b16 %v1183
    %v1456 = vunpack.c.h.b16 %v1183
    %v1457 = vunpack.c.l.b16 %v1184
    %v1458 = vunpack.c.h.b16 %v1184
    %v1459 = vunpack.c.l.b16 %v1185
    %v1460 = vunpack.c.h.b16 %v1185
    %v1461 = vunpack.c.l.b16 %v1186
    %v1462 = vunpack.c.h.b16 %v1186
    %v1463 = vunpack.c.l.b16 %v1187
    %v1464 = vunpack.c.h.b16 %v1187
    %v1465 = vunpack.c.l.b16 %v1188
    %v1466 = vunpack.c.h.b16 %v1188
    %v1467 = vunpack.c.l.b16 %v1189
    %v1468 = vunpack.c.h.b16 %v1189
    %v1469 = vunpack.c.l.b16 %v1190
    %v1470 = vunpack.c.h.b16 %v1190
    %v1471 = vunpack.c.l.b16 %v1191
    %v1472 = vunpack.c.h.b16 %v1191
    %v1473 = vunpack.c.l.b16 %v1192
    %v1474 = vunpack.c.h.b16 %v1192
    %v1475 = vunpack.c.l.b16 %v1193
    %v1476 = vunpack.c.h.b16 %v1193
    %v1477 = vunpack.c.l.b16 %v1194
    %v1478 = vunpack.c.h.b16 %v1194
    %v1479 = vunpack.c.l.b16 %v1195
    %v1480 = vunpack.c.h.b16 %v1195
    %v1481 = vunpack.c.l.b16 %v1196
    %v1482 = vunpack.c.h.b16 %v1196
    %v1483 = vunpack.c.l.b16 %v1197
    %v1484 = vunpack.c.h.b16 %v1197
    %v1485 = vunpack.c.l.b16 %v1198
    %v1486 = vunpack.c.h.b16 %v1198
    %v1487 = vunpack.c.l.b16 %v1199
    %v1488 = vunpack.c.h.b16 %v1199
    %v1489 = vunpack.c.l.b16 %v1200
    %v1490 = vunpack.c.h.b16 %v1200
    %v1491 = vunpack.c.l.b16 %v1201
    %v1492 = vunpack.c.h.b16 %v1201
    %v1493 = vunpack.c.l.b16 %v1202
    %v1494 = vunpack.c.h.b16 %v1202
    %v1495 = vunpack.c.l.b16 %v1203
    %v1496 = vunpack.c.h.b16 %v1203
    %v1497 = vunpack.c.l.b16 %v1204
    %v1498 = vunpack.c.h.b16 %v1204
    %v1499 = vunpack.c.l.b16 %v1205
    %v1500 = vunpack.c.h.b16 %v1205
    %v1501 = vunpack.c.l.b16 %v1206
    %v1502 = vunpack.c.h.b16 %v1206
    %v1503 = vunpack.c.l.b16 %v1207
    %v1504 = vunpack.c.h.b16 %v1207
    %v1505 = vunpack.c.l.b16 %v1208
    %v1506 = vunpack.c.h.b16 %v1208
    %v1507 = vunpack.c.l.b16 %v1209
    %v1508 = vunpack.c.h.b16 %v1209
    %v1509 = vunpack.c.l.b16 %v1210
    %v1510 = vunpack.c.h.b16 %v1210
    %v1511 = vunpack.c.l.b16 %v1211
    %v1512 = vunpack.c.h.b16 %v1211
    %v1513 = vunpack.c.l.b16 %v1212
    %v1514 = vunpack.c.h.b16 %v1212
    %v1515 = vunpack.c.l.b16 %v1213
    %v1516 = vunpack.c.h.b16 %v1213
    %v1517 = vunpack.c.l.b16 %v1214
    %v1518 = vunpack.c.h.b16 %v1214
    %v1519 = vunpack.c.l.b16 %v1215
    %v1520 = vunpack.c.h.b16 %v1215
    %v1521 = vunpack.c.l.b16 %v1216
    %v1522 = vunpack.c.h.b16 %v1216
    %v1523 = vunpack.c.l.b16 %v1217
    %v1524 = vunpack.c.h.b16 %v1217
    %v1525 = vunpack.c.l.b16 %v1218
    %v1526 = vunpack.c.h.b16 %v1218
    %v1527 = vunpack.c.l.b16 %v1219
    %v1528 = vunpack.c.h.b16 %v1219
    %v1529 = vunpack.c.l.b16 %v1220
    %v1530 = vunpack.c.h.b16 %v1220
    %v1531 = vunpack.c.l.b16 %v1221
    %v1532 = vunpack.c.h.b16 %v1221
    %v1533 = vunpack.c.l.b16 %v1222
    %v1534 = vunpack.c.h.b16 %v1222
    %v1535 = vunpack.c.l.b16 %v1223
    %v1536 = vunpack.c.h.b16 %v1223
    %v1537 = vunpack.c.l.b16 %v1224
    %v1538 = vunpack.c.h.b16 %v1224
    %v1539 = vunpack.c.l.b16 %v1225
    %v1540 = vunpack.c.h.b16 %v1225
    %v1541 = vunpack.c.l.b16 %v1226
    %v1542 = vunpack.c.h.b16 %v1226
    %v1543 = vunpack.c.l.b16 %v1227
    %v1544 = vunpack.c.h.b16 %v1227
    %v1545 = vunpack.c.l.b16 %v1228
    %v1546 = vunpack.c.h.b16 %v1228
    %v1547 = vunpack.c.l.b16 %v1229
    %v1548 = vunpack.c.h.b16 %v1229
    %v1549 = vunpack.c.l.b16 %v1230
    %v1550 = vunpack.c.h.b16 %v1230
    %v1551 = vunpack.c.l.b16 %v1231
    %v1552 = vunpack.c.h.b16 %v1231
    %v1553 = vunpack.c.l.b16 %v1232
    %v1554 = vunpack.c.h.b16 %v1232
    %v1555 = vunpack.c.l.b16 %v1233
    %v1556 = vunpack.c.h.b16 %v1233
    %v1557 = vunpack.c.l.b16 %v1234
    %v1558 = vunpack.c.h.b16 %v1234
    %v1559 = vunpack.c.l.b16 %v1235
    %v1560 = vunpack.c.h.b16 %v1235
    %v1561 = vunpack.c.l.b16 %v1236
    %v1562 = vunpack.c.h.b16 %v1236
    %v1563 = vunpack.c.l.b16 %v1237
    %v1564 = vunpack.c.h.b16 %v1237
    %v1565 = vunpack.c.l.b16 %v1238
    %v1566 = vunpack.c.h.b16 %v1238
    %v1567 = vunpack.c.l.b16 %v1239
    %v1568 = vunpack.c.h.b16 %v1239
    %v1569 = vunpack.c.l.b16 %v1240
    %v1570 = vunpack.c.h.b16 %v1240
    %v1571 = vunpack.c.l.b16 %v1241
    %v1572 = vunpack.c.h.b16 %v1241
    %v1573 = vunpack.c.l.b16 %v1242
    %v1574 = vunpack.c.h.b16 %v1242
    %v1575 = vunpack.c.l.b16 %v1243
    %v1576 = vunpack.c.h.b16 %v1243
    %v1577 = vunpack.c.l.b16 %v1244
    %v1578 = vunpack.c.h.b16 %v1244
    %v1579 = vunpack.c.l.b16 %v1245
    %v1580 = vunpack.c.h.b16 %v1245
    %v1581 = vunpack.c.l.b16 %v1246
    %v1582 = vunpack.c.h.b16 %v1246
    %v1583 = vunpack.c.l.b16 %v1247
    %v1584 = vunpack.c.h.b16 %v1247
    %v1585 = vunpack.c.l.b16 %v1248
    %v1586 = vunpack.c.h.b16 %v1248
    %v1587 = vunpack.c.l.b16 %v1249
    %v1588 = vunpack.c.h.b16 %v1249
    %v1589 = vunpack.c.l.b16 %v1250
    %v1590 = vunpack.c.h.b16 %v1250
    %v1591 = vunpack.c.l.b16 %v1251
    %v1592 = vunpack.c.h.b16 %v1251
    %v1593 = vunpack.c.l.b16 %v1252
    %v1594 = vunpack.c.h.b16 %v1252
    %v1595 = vunpack.c.l.b16 %v1253
    %v1596 = vunpack.c.h.b16 %v1253
    %v1597 = vunpack.c.l.b16 %v1254
    %v1598 = vunpack.c.h.b16 %v1254
    %v1599 = vunpack.c.l.b16 %v1255
    %v1600 = vunpack.c.h.b16 %v1255
    %v1601 = vunpack.c.l.b16 %v1256
    %v1602 = vunpack.c.h.b16 %v1256
    %v1603 = vunpack.c.l.b16 %v1257
    %v1604 = vunpack.c.h.b16 %v1257
    %v1605 = vunpack.c.l.b16 %v1258
    %v1606 = vunpack.c.h.b16 %v1258
    %v1607 = vunpack.c.l.b16 %v1259
    %v1608 = vunpack.c.h.b16 %v1259
    %v1609 = vunpack.c.l.b16 %v1260
    %v1610 = vunpack.c.h.b16 %v1260
    %v1611 = vunpack.c.l.b16 %v1261
    %v1612 = vunpack.c.h.b16 %v1261
    %v1613 = vunpack.c.l.b16 %v1262
    %v1614 = vunpack.c.h.b16 %v1262
    %v1615 = vunpack.c.l.b16 %v1263
    %v1616 = vunpack.c.h.b16 %v1263
    %v1617 = vunpack.c.l.b16 %v1264
    %v1618 = vunpack.c.h.b16 %v1264
    %v1619 = vunpack.c.l.b16 %v1265
    %v1620 = vunpack.c.h.b16 %v1265
    %v1621 = vunpack.c.l.b16 %v1266
    %v1622 = vunpack.c.h.b16 %v1266
    %v1623 = vunpack.c.l.b16 %v1267
    %v1624 = vunpack.c.h.b16 %v1267
    %v1625 = vunpack.c.l.b16 %v1268
    %v1626 = vunpack.c.h.b16 %v1268
    %v1627 = vunpack.c.l.b16 %v1269
    %v1628 = vunpack.c.h.b16 %v1269
    %v1629 = vunpack.c.l.b16 %v1270
    %v1630 = vunpack.c.h.b16 %v1270
    %v1631 = vunpack.c.l.b16 %v1271
    %v1632 = vunpack.c.h.b16 %v1271
    %v1633 = vunpack.c.l.b16 %v1272
    %v1634 = vunpack.c.h.b16 %v1272
    %v1635 = vunpack.c.l.b16 %v1273
    %v1636 = vunpack.c.h.b16 %v1273
    %v1637 = vunpack.c.l.b16 %v1274
    %v1638 = vunpack.c.h.b16 %v1274
    %v1639 = vunpack.c.l.b16 %v1275
    %v1640 = vunpack.c.h.b16 %v1275
    %v1641 = vunpack.c.l.b16 %v1276
    %v1642 = vunpack.c.h.b16 %v1276
    %v1643 = vunpack.c.l.b16 %v1277
    %v1644 = vunpack.c.h.b16 %v1277
    %v1645 = vunpack.c.l.b16 %v1278
    %v1646 = vunpack.c.h.b16 %v1278
    %v1647 = vunpack.c.l.b16 %v1279
    %v1648 = vunpack.c.h.b16 %v1279
    %v1649 = vunpack.c.l.b16 %v1280
    %v1650 = vunpack.c.h.b16 %v1280
    %v1651 = vunpack.c.l.b16 %v1281
    %v1652 = vunpack.c.h.b16 %v1281
    %v1653 = vunpack.c.l.b16 %v1282
    %v1654 = vunpack.c.h.b16 %v1282
    %v1655 = vunpack.c.l.b16 %v1283
    %v1656 = vunpack.c.h.b16 %v1283
    %v1657 = vunpack.c.l.b16 %v1284
    %v1658 = vunpack.c.h.b16 %v1284
    %v1659 = vunpack.c.l.b16 %v1285
    %v1660 = vunpack.c.h.b16 %v1285
    %v1661 = vunpack.c.l.b16 %v1286
    %v1662 = vunpack.c.h.b16 %v1286
    %v1663 = vunpack.c.l.b16 %v1287
    %v1664 = vunpack.c.h.b16 %v1287
    %v1665 = vunpack.c.l.b16 %v1288
    %v1666 = vunpack.c.h.b16 %v1288
    %v1667 = vunpack.c.l.b16 %v1289
    %v1668 = vunpack.c.h.b16 %v1289
    %v1669 = vunpack.c.l.b16 %v1290
    %v1670 = vunpack.c.h.b16 %v1290
    %v1671 = vunpack.c.l.b16 %v1291
    %v1672 = vunpack.c.h.b16 %v1291
    %v1673 = vunpack.c.l.b16 %v1292
    %v1674 = vunpack.c.h.b16 %v1292
    %v1675 = vunpack.c.l.b16 %v1293
    %v1676 = vunpack.c.h.b16 %v1293
    %v1677 = vunpack.c.l.b16 %v1294
    %v1678 = vunpack.c.h.b16 %v1294
    %v1679 = vunpack.c.l.b16 %v1295
    %v1680 = vunpack.c.h.b16 %v1295
    %v1681 = vunpack.c.l.b16 %v1296
    %v1682 = vunpack.c.h.b16 %v1296
    %v1683 = vunpack.c.l.b16 %v1297
    %v1684 = vunpack.c.h.b16 %v1297
    %v1685 = vunpack.c.l.b16 %v1298
    %v1686 = vunpack.c.h.b16 %v1298
    %v1687 = vunpack.c.l.b16 %v1299
    %v1688 = vunpack.c.h.b16 %v1299
    %v1689 = vunpack.c.l.b16 %v1300
    %v1690 = vunpack.c.h.b16 %v1300
    %v1691 = vunpack.c.l.b16 %v1301
    %v1692 = vunpack.c.h.b16 %v1301
    %v1693 = vunpack.c.l.b16 %v1302
    %v1694 = vunpack.c.h.b16 %v1302
    %v1695 = vunpack.c.l.b16 %v1303
    %v1696 = vunpack.c.h.b16 %v1303
    %v1697 = vunpack.c.l.b16 %v1304
    %v1698 = vunpack.c.h.b16 %v1304
    %v1699 = vunpack.c.l.b16 %v1305
    %v1700 = vunpack.c.h.b16 %v1305
    %v1701 = vunpack.c.l.b16 %v1306
    %v1702 = vunpack.c.h.b16 %v1306
    %v1703 = vpack.c.b16 %v1449, %v1447
    %v1704 = vpack.c.b16 %v1450, %v1448
    %v1705 = vpack.c.b16 %v1453, %v1451
    %v1706 = vpack.c.b16 %v1454, %v1452
    %v1707 = vpack.c.b16 %v1457, %v1455
    %v1708 = vpack.c.b16 %v1458, %v1456
    %v1709 = vpack.c.b16 %v1461, %v1459
    %v1710 = vpack.c.b16 %v1462, %v1460
    %v1711 = vpack.c.b16 %v1465, %v1463
    %v1712 = vpack.c.b16 %v1466, %v1464
    %v1713 = vpack.c.b16 %v1469, %v1467
    %v1714 = vpack.c.b16 %v1470, %v1468
    %v1715 = vpack.c.b16 %v1473, %v1471
    %v1716 = vpack.c.b16 %v1474, %v1472
    %v1717 = vpack.c.b16 %v1477, %v1475
    %v1718 = vpack.c.b16 %v1478, %v1476
    %v1719 = vpack.c.b16 %v1481, %v1479
    %v1720 = vpack.c.b16 %v1482, %v1480
    %v1721 = vpack.c.b16 %v1485, %v1483
    %v1722 = vpack.c.b16 %v1486, %v1484
    %v1723 = vpack.c.b16 %v1489, %v1487
    %v1724 = vpack.c.b16 %v1490, %v1488
    %v1725 = vpack.c.b16 %v1493, %v1491
    %v1726 = vpack.c.b16 %v1494, %v1492
    %v1727 = vpack.c.b16 %v1497, %v1495
    %v1728 = vpack.c.b16 %v1498, %v1496
    %v1729 = vpack.c.b16 %v1501, %v1499
    %v1730 = vpack.c.b16 %v1502, %v1500
    %v1731 = vpack.c.b16 %v1505, %v1503
    %v1732 = vpack.c.b16 %v1506, %v1504
    %v1733 = vpack.c.b16 %v1509, %v1507
    %v1734 = vpack.c.b16 %v1510, %v1508
    %v1735 = vpack.c.b16 %v1513, %v1511
    %v1736 = vpack.c.b16 %v1514, %v1512
    %v1737 = vpack.c.b16 %v1517, %v1515
    %v1738 = vpack.c.b16 %v1518, %v1516
    %v1739 = vpack.c.b16 %v1521, %v1519
    %v1740 = vpack.c.b16 %v1522, %v1520
    %v1741 = vpack.c.b16 %v1525, %v1523
    %v1742 = vpack.c.b16 %v1526, %v1524
    %v1743 = vpack.c.b16 %v1529, %v1527
    %v1744 = vpack.c.b16 %v1530, %v1528
    %v1745 = vpack.c.b16 %v1533, %v1531
    %v1746 = vpack.c.b16 %v1534, %v1532
    %v1747 = vpack.c.b16 %v1537, %v1535
    %v1748 = vpack.c.b16 %v1538, %v1536
    %v1749 = vpack.c.b16 %v1541, %v1539
    %v1750 = vpack.c.b16 %v1542, %v1540
    %v1751 = vpack.c.b16 %v1545, %v1543
    %v1752 = vpack.c.b16 %v1546, %v1544
    %v1753 = vpack.c.b16 %v1549, %v1547
    %v1754 = vpack.c.b16 %v1550, %v1548
    %v1755 = vpack.c.b16 %v1553, %v1551
    %v1756 = vpack.c.b16 %v1554, %v1552
    %v1757 = vpack.c.b16 %v1557, %v1555
    %v1758 = vpack.c.b16 %v1558, %v1556
    %v1759 = vpack.c.b16 %v1561, %v1559
    %v1760 = vpack.c.b16 %v1562, %v1560
    %v1761 = vpack.c.b16 %v1565, %v1563
    %v1762 = vpack.c.b16 %v1566, %v1564
    %v1763 = vpack.c.b16 %v1569, %v1567
    %v1764 = vpack.c.b16 %v1570, %v1568
    %v1765 = vpack.c.b16 %v1573, %v1571
    %v1766 = vpack.c.b16 %v1574, %v1572
    %v1767 = vpack.c.b16 %v1577, %v1575
    %v1768 = vpack.c.b16 %v1578, %v1576
    %v1769 = vpack.c.b16 %v1581, %v1579
    %v1770 = vpack.c.b16 %v1582, %v1580
    %v1771 = vpack.c.b16 %v1585, %v1583
    %v1772 = vpack.c.b16 %v1586, %v1584
    %v1773 = vpack.c.b16 %v1589, %v1587
    %v1774 = vpack.c.b16 %v1590, %v1588
    %v1775 = vpack.c.b16 %v1593, %v1591
    %v1776 = vpack.c.b16 %v1594, %v1592
    %v1777 = vpack.c.b16 %v1597, %v1595
    %v1778 = vpack.c.b16 %v1598, %v1596
    %v1779 = vpack.c.b16 %v1601, %v1599
    %v1780 = vpack.c.b16 %v1602, %v1600
    %v1781 = vpack.c.b16 %v1605, %v1603
    %v1782 = vpack.c.b16 %v1606, %v1604
    %v1783 = vpack.c.b16 %v1609, %v1607
    %v1784 = vpack.c.b16 %v1610, %v1608
    %v1785 = vpack.c.b16 %v1613, %v1611
    %v1786 = vpack.c.b16 %v1614, %v1612
    %v1787 = vpack.c.b16 %v1617, %v1615
    %v1788 = vpack.c.b16 %v1618, %v1616
    %v1789 = vpack.c.b16 %v1621, %v1619
    %v1790 = vpack.c.b16 %v1622, %v1620
    %v1791 = vpack.c.b16 %v1625, %v1623
    %v1792 = vpack.c.b16 %v1626, %v1624
    %v1793 = vpack.c.b16 %v1629, %v1627
    %v1794 = vpack.c.b16 %v1630, %v1628
    %v1795 = vpack.c.b16 %v1633, %v1631
    %v1796 = vpack.c.b16 %v1634, %v1632
    %v1797 = vpack.c.b16 %v1637, %v1635
    %v1798 = vpack.c.b16 %v1638, %v1636
    %v1799 = vpack.c.b16 %v1641, %v1639
    %v1800 = vpack.c.b16 %v1642, %v1640
    %v1801 = vpack.c.b16 %v1645, %v1643
    %v1802 = vpack.c.b16 %v1646, %v1644
    %v1803 = vpack.c.b16 %v1649, %v1647
    %v1804 = vpack.c.b16 %v1650, %v1648
    %v1805 = vpack.c.b16 %v1653, %v1651
    %v1806 = vpack.c.b16 %v1654, %v1652
    %v1807 = vpack.c.b16 %v1657, %v1655
    %v1808 = vpack.c.b16 %v1658, %v1656
    %v1809 = vpack.c.b16 %v1661, %v1659
    %v1810 = vpack.c.b16 %v1662, %v1660
    %v1811 = vpack.c.b16 %v1665, %v1663
    %v1812 = vpack.c.b16 %v1666, %v1664
    %v1813 = vpack.c.b16 %v1669, %v1667
    %v1814 = vpack.c.b16 %v1670, %v1668
    %v1815 = vpack.c.b16 %v1673, %v1671
    %v1816 = vpack.c.b16 %v1674, %v1672
    %v1817 = vpack.c.b16 %v1677, %v1675
    %v1818 = vpack.c.b16 %v1678, %v1676
    %v1819 = vpack.c.b16 %v1681, %v1679
    %v1820 = vpack.c.b16 %v1682, %v1680
    %v1821 = vpack.c.b16 %v1685, %v1683
    %v1822 = vpack.c.b16 %v1686, %v1684
    %v1823 = vpack.c.b16 %v1689, %v1687
    %v1824 = vpack.c.b16 %v1690, %v1688
    %v1825 = vpack.c.b16 %v1693, %v1691
    %v1826 = vpack.c.b16 %v1694, %v1692
    %v1827 = vpack.c.b16 %v1697, %v1695
    %v1828 = vpack.c.b16 %v1698, %v1696
    %v1829 = vpack.c.b16 %v1701, %v1699
    %v1830 = vpack.c.b16 %v1702, %v1700
    %1959 = vmatprep.subr.bf16.mxu0 %v1704
    %1960 = vmatpush1.bf16.msra.mxu0 %v1703
    %1961 = vmatprep.subr.bf16.mxu0 %v1706
    %1962 = vmatpush1.bf16.msra.mxu0 %v1705
    %1963 = vmatprep.subr.bf16.mxu0 %v1708
    %1964 = vmatpush1.bf16.msra.mxu0 %v1707
    %1965 = vmatprep.subr.bf16.mxu0 %v1710
    %1966 = vmatpush1.bf16.msra.mxu0 %v1709
    %1967 = vmatprep.subr.bf16.mxu0 %v1712
    %1968 = vmatpush1.bf16.msra.mxu0 %v1711
    %1969 = vmatprep.subr.bf16.mxu0 %v1714
    %1970 = vmatpush1.bf16.msra.mxu0 %v1713
    %1971 = vmatprep.subr.bf16.mxu0 %v1716
    %1972 = vmatpush1.bf16.msra.mxu0 %v1715
    %1973 = vmatprep.subr.bf16.mxu0 %v1718
    %1974 = vmatpush1.bf16.msra.mxu0 %v1717
    %1975 = vmatprep.subr.bf16.mxu0 %v1720
    %1976 = vmatpush1.bf16.msra.mxu0 %v1719
    %1977 = vmatprep.subr.bf16.mxu0 %v1722
    %1978 = vmatpush1.bf16.msra.mxu0 %v1721
    %1979 = vmatprep.subr.bf16.mxu0 %v1724
    %1980 = vmatpush1.bf16.msra.mxu0 %v1723
    %1981 = vmatprep.subr.bf16.mxu0 %v1726
    %1982 = vmatpush1.bf16.msra.mxu0 %v1725
    %1983 = vmatprep.subr.bf16.mxu0 %v1728
    %1984 = vmatpush1.bf16.msra.mxu0 %v1727
    %1985 = vmatprep.subr.bf16.mxu0 %v1730
    %1986 = vmatpush1.bf16.msra.mxu0 %v1729
    %1987 = vmatprep.subr.bf16.mxu0 %v1732
    %1988 = vmatpush1.bf16.msra.mxu0 %v1731
    %1989 = vmatprep.subr.bf16.mxu0 %v1734
    %1990 = vmatpush1.bf16.msra.mxu0 %v1733
    %1991 = vmatprep.mubr.bf16.mxu0 %v1172
    %1992 = vmatmul.mubr.bf16.gmra.mrb[0].mxu0 %v1171
    %v1993 = vpop.f32.mrb[0].mxu0
    %v1994 = vadd.f32 %v1312, %v1993
    %v1995 = vpop.f32.mrb[0].mxu0
    %v1996 = vadd.f32 %v1316, %v1995
    %v1997 = vpop.f32.mrb[0].mxu0
    %v1998 = vpop.f32.mrb[0].mxu0
    %1999 = vdwg.mxu0
    %2000 = vmatprep.subr.bf16.mxu0 %v1736
    %2001 = vmatpush1.bf16.msra.mxu0 %v1735
    %2002 = vmatprep.subr.bf16.mxu0 %v1738
    %2003 = vmatpush1.bf16.msra.mxu0 %v1737
    %2004 = vmatprep.subr.bf16.mxu0 %v1740
    %2005 = vmatpush1.bf16.msra.mxu0 %v1739
    %2006 = vmatprep.subr.bf16.mxu0 %v1742
    %2007 = vmatpush1.bf16.msra.mxu0 %v1741
    %2008 = vmatprep.subr.bf16.mxu0 %v1744
    %2009 = vmatpush1.bf16.msra.mxu0 %v1743
    %2010 = vmatprep.subr.bf16.mxu0 %v1746
    %2011 = vmatpush1.bf16.msra.mxu0 %v1745
    %2012 = vmatprep.subr.bf16.mxu0 %v1748
    %2013 = vmatpush1.bf16.msra.mxu0 %v1747
    %2014 = vmatprep.subr.bf16.mxu0 %v1750
    %2015 = vmatpush1.bf16.msra.mxu0 %v1749
    %2016 = vmatprep.subr.bf16.mxu0 %v1752
    %2017 = vmatpush1.bf16.msra.mxu0 %v1751
    %2018 = vmatprep.subr.bf16.mxu0 %v1754
    %2019 = vmatpush1.bf16.msra.mxu0 %v1753
    %2020 = vmatprep.subr.bf16.mxu0 %v1756
    %2021 = vmatpush1.bf16.msra.mxu0 %v1755
    %2022 = vmatprep.subr.bf16.mxu0 %v1758
    %2023 = vmatpush1.bf16.msra.mxu0 %v1757
    %2024 = vmatprep.subr.bf16.mxu0 %v1760
    %2025 = vmatpush1.bf16.msra.mxu0 %v1759
    %2026 = vmatprep.subr.bf16.mxu0 %v1762
    %2027 = vmatpush1.bf16.msra.mxu0 %v1761
    %2028 = vmatprep.subr.bf16.mxu0 %v1764
    %2029 = vmatpush1.bf16.msra.mxu0 %v1763
    %2030 = vmatprep.subr.bf16.mxu0 %v1766
    %2031 = vmatpush1.bf16.msra.mxu0 %v1765
    %2032 = vmatprep.mubr.bf16.mxu0 %v1174
    %2033 = vmatmul.mubr.bf16.gmra.mrb[0].mxu0 %v1173
    %v2034 = vpop.f32.mrb[0].mxu0
    %v2035 = vadd.f32 %v1994, %v2034
    %v2036 = vpop.f32.mrb[0].mxu0
    %v2037 = vadd.f32 %v1996, %v2036
    %v2038 = vpop.f32.mrb[0].mxu0
    %v2039 = vpop.f32.mrb[0].mxu0
    %2040 = vdwg.mxu0
    %2041 = vmatprep.subr.bf16.mxu0 %v1768
    %2042 = vmatpush1.bf16.msra.mxu0 %v1767
    %2043 = vmatprep.subr.bf16.mxu0 %v1770
    %2044 = vmatpush1.bf16.msra.mxu0 %v1769
    %2045 = vmatprep.subr.bf16.mxu0 %v1772
    %2046 = vmatpush1.bf16.msra.mxu0 %v1771
    %2047 = vmatprep.subr.bf16.mxu0 %v1774
    %2048 = vmatpush1.bf16.msra.mxu0 %v1773
    %2049 = vmatprep.subr.bf16.mxu0 %v1776
    %2050 = vmatpush1.bf16.msra.mxu0 %v1775
    %2051 = vmatprep.subr.bf16.mxu0 %v1778
    %2052 = vmatpush1.bf16.msra.mxu0 %v1777
    %2053 = vmatprep.subr.bf16.mxu0 %v1780
    %2054 = vmatpush1.bf16.msra.mxu0 %v1779
    %2055 = vmatprep.subr.bf16.mxu0 %v1782
    %2056 = vmatpush1.bf16.msra.mxu0 %v1781
    %2057 = vmatprep.subr.bf16.mxu0 %v1784
    %2058 = vmatpush1.bf16.msra.mxu0 %v1783
    %2059 = vmatprep.subr.bf16.mxu0 %v1786
    %2060 = vmatpush1.bf16.msra.mxu0 %v1785
    %2061 = vmatprep.subr.bf16.mxu0 %v1788
    %2062 = vmatpush1.bf16.msra.mxu0 %v1787
    %2063 = vmatprep.subr.bf16.mxu0 %v1790
    %2064 = vmatpush1.bf16.msra.mxu0 %v1789
    %2065 = vmatprep.subr.bf16.mxu0 %v1792
    %2066 = vmatpush1.bf16.msra.mxu0 %v1791
    %2067 = vmatprep.subr.bf16.mxu0 %v1794
    %2068 = vmatpush1.bf16.msra.mxu0 %v1793
    %2069 = vmatprep.subr.bf16.mxu0 %v1796
    %2070 = vmatpush1.bf16.msra.mxu0 %v1795
    %2071 = vmatprep.subr.bf16.mxu0 %v1798
    %2072 = vmatpush1.bf16.msra.mxu0 %v1797
    %2073 = vmatprep.mubr.bf16.mxu0 %v1176
    %2074 = vmatmul.mubr.bf16.gmra.mrb[0].mxu0 %v1175
    %v2075 = vpop.f32.mrb[0].mxu0
    %v2076 = vadd.f32 %v2035, %v2075
    %v2077 = vpop.f32.mrb[0].mxu0
    %v2078 = vadd.f32 %v2037, %v2077
    %v2079 = vpop.f32.mrb[0].mxu0
    %v2080 = vpop.f32.mrb[0].mxu0
    %2081 = vdwg.mxu0
    %2082 = vmatprep.subr.bf16.mxu0 %v1800
    %2083 = vmatpush1.bf16.msra.mxu0 %v1799
    %2084 = vmatprep.subr.bf16.mxu0 %v1802
    %2085 = vmatpush1.bf16.msra.mxu0 %v1801
    %2086 = vmatprep.subr.bf16.mxu0 %v1804
    %2087 = vmatpush1.bf16.msra.mxu0 %v1803
    %2088 = vmatprep.subr.bf16.mxu0 %v1806
    %2089 = vmatpush1.bf16.msra.mxu0 %v1805
    %2090 = vmatprep.subr.bf16.mxu0 %v1808
    %2091 = vmatpush1.bf16.msra.mxu0 %v1807
    %2092 = vmatprep.subr.bf16.mxu0 %v1810
    %2093 = vmatpush1.bf16.msra.mxu0 %v1809
    %2094 = vmatprep.subr.bf16.mxu0 %v1812
    %2095 = vmatpush1.bf16.msra.mxu0 %v1811
    %2096 = vmatprep.subr.bf16.mxu0 %v1814
    %2097 = vmatpush1.bf16.msra.mxu0 %v1813
    %2098 = vmatprep.subr.bf16.mxu0 %v1816
    %2099 = vmatpush1.bf16.msra.mxu0 %v1815
    %2100 = vmatprep.subr.bf16.mxu0 %v1818
    %2101 = vmatpush1.bf16.msra.mxu0 %v1817
    %2102 = vmatprep.subr.bf16.mxu0 %v1820
    %2103 = vmatpush1.bf16.msra.mxu0 %v1819
    %2104 = vmatprep.subr.bf16.mxu0 %v1822
    %2105 = vmatpush1.bf16.msra.mxu0 %v1821
    %2106 = vmatprep.subr.bf16.mxu0 %v1824
    %2107 = vmatpush1.bf16.msra.mxu0 %v1823
    %2108 = vmatprep.subr.bf16.mxu0 %v1826
    %2109 = vmatpush1.bf16.msra.mxu0 %v1825
    %2110 = vmatprep.subr.bf16.mxu0 %v1828
    %2111 = vmatpush1.bf16.msra.mxu0 %v1827
    %2112 = vmatprep.subr.bf16.mxu0 %v1830
    %2113 = vmatpush1.bf16.msra.mxu0 %v1829
    %2114 = vmatprep.mubr.bf16.mxu0 %v1178
    %2115 = vmatmul.mubr.bf16.gmra.mrb[0].mxu0 %v1177
    %v2116 = vpop.f32.mrb[0].mxu0
    %v2117 = vadd.f32 %v2076, %v2116
    %v2118 = vpop.f32.mrb[0].mxu0
    %v2119 = vadd.f32 %v2078, %v2118
    %v2120 = vpop.f32.mrb[0].mxu0
    %v2121 = vpop.f32.mrb[0].mxu0
    %2122 = vdwg.mxu0
    %v2123 = vmax.f32 %v2117, 0.0
    %v2124 = vmax.f32 %v2119, 0.0
    %v2125 = vpack.c.bf16 %v2123, %v2123
    %v2126 = vpack.c.bf16 %v2124, %v2124
    %v2127 = vld [vmem:[%s7] sm:$0x3]
    %v2128 = vld [vmem:[#allocation2] sm:$0x1]
    %2130 = vset.pattern.permute.xlu0 0
    %2131 = vperm.xlu0 %2130, %v2128
    %v2132 = vpop.permute.xlu0 %2131
    %v2134 = vlaneseq
    %v2135 = vshrl.u32 %v2134, 7
    %v2136 = vsub.s32 0, %v2135
    %v2137 = vrot.slane %v2132, %v2136
    %v2140 = vunpack.c.l.s4 1966171168
    %v2141 = vunpack.c.0.s8 %v2140
    %v2142 = vlaneseq
    %v2143 = vshrl.u32 %v2142, 7
    %v2144 = vsub.s32 %v2141, %v2143
    %v2145 = vrot.slane %v2127, %v2144
    %v2146 = vcombine.high %v2145, %v2145
    %v2148 = vunpack.c.l.s4 1966171168
    %v2149 = vunpack.c.0.s8 %v2148
    %v2150 = vlaneseq
    %v2151 = vshrl.u32 %v2150, 7
    %v2152 = vsub.s32 %v2149, %v2151
    %v2153 = vrot.slane %v2145, %v2152
    %v2155 = vunpack.c.l.s4 1966171168
    %v2156 = vunpack.c.0.s8 %v2155
    %v2157 = vlaneseq
    %v2158 = vshrl.u32 %v2157, 7
    %v2159 = vsub.s32 %v2156, %v2158
    %v2160 = vrot.slane %v2146, %v2159
    %2163 = vmatprep.subr.bf16.mxu0 %v2126
    %2164 = vmatpush1.bf16.xpose.msra.mxu0 %v2125
    %2165 = vmatprep.subr.bf16.mxu0 0
    %2166 = vmatpush1.bf16.xpose.msra.mxu0 0
    %2167 = vmatprep.subr.bf16.mxu0 0
    %2168 = vmatpush1.bf16.xpose.msra.mxu0 0
    %2169 = vmatprep.subr.bf16.mxu0 0
    %2170 = vmatpush1.bf16.xpose.msra.mxu0 0
    %2171 = vmatprep.subr.bf16.mxu0 0
    %2172 = vmatpush1.bf16.xpose.msra.mxu0 0
    %2173 = vmatprep.subr.bf16.mxu0 0
    %2174 = vmatpush1.bf16.xpose.msra.mxu0 0
    %2175 = vmatprep.subr.bf16.mxu0 0
    %2176 = vmatpush1.bf16.xpose.msra.mxu0 0
    %2177 = vmatprep.subr.bf16.mxu0 0
    %2178 = vmatpush1.bf16.xpose.msra.mxu0 0
    %2179 = vmatprep.subr.bf16.mxu0 0
    %2180 = vmatpush1.bf16.xpose.msra.mxu0 0
    %2181 = vmatprep.subr.bf16.mxu0 0
    %2182 = vmatpush1.bf16.xpose.msra.mxu0 0
    %2183 = vmatprep.subr.bf16.mxu0 0
    %2184 = vmatpush1.bf16.xpose.msra.mxu0 0
    %2185 = vmatprep.subr.bf16.mxu0 0
    %2186 = vmatpush1.bf16.xpose.msra.mxu0 0
    %2187 = vmatprep.subr.bf16.mxu0 0
    %2188 = vmatpush1.bf16.xpose.msra.mxu0 0
    %2189 = vmatprep.subr.bf16.mxu0 0
    %2190 = vmatpush1.bf16.xpose.msra.mxu0 0
    %2191 = vmatprep.subr.bf16.mxu0 0
    %2192 = vmatpush1.bf16.xpose.msra.mxu0 0
    %2193 = vmatprep.subr.bf16.mxu0 0
    %2194 = vmatpush1.bf16.xpose.msra.mxu0 0
    %2195 = vmatprep.mubr.bf16.mxu0 %v2160
    %2196 = vmatmul.mubr.bf16.gmra.mrb[0].mxu0 %v2153
    %v2197 = vpop.f32.mrb[0].mxu0
    %v2198 = vadd.f32 %v2137, %v2197
    %v2199 = vpop.f32.mrb[0].mxu0
    %v2200 = vpop.f32.mrb[0].mxu0
    %v2201 = vpop.f32.mrb[0].mxu0
    %2202 = vdwg.mxu0
    %vm2203 = vcmask 57344
    %2204 = vst.msk [vmem:[#allocation11] sm:$0x1] %vm2203, %v2198
    // Predicated region
    $region54: #{tpu_custom_call.1} parent=1 // pred_check
      _
    $region55: #{tpu_custom_call.1} parent=1 // pred_check_branch
      %2206 = sbr.rel (0) target = $region57
    $region56: #{tpu_custom_call.1} parent=1 // pred_region
      %s2208 = ssub.s32 16, 16
      %2209 = vsyncadd [#allocation5], %s2208
      %s2211 = sshll.u32 [#allocation11], 4
      %s2212 = int_to_ptr.vmem [resolvable:$true] %s2211
      %2214 = dma.vmem_to_hbm [thread:$0]  %s2212, 16, %s9, [#allocation5]
    $region57: #{tpu_custom_call.1} parent=1 // pred_fallthru
      _
    // Predicated region
    $region58: #{tpu_custom_call.1} parent=1 // pred_check
      _
    $region59: #{tpu_custom_call.1} parent=1 // pred_check_branch
      %2216 = sbr.rel (0) target = $region61
    $region60: #{tpu_custom_call.1} parent=1 // pred_region
      %2217 = dma.done [#allocation5], 16
    $region61: #{tpu_custom_call.1} parent=1 // pred_fallthru
      _
    %2218 = vsyncpa [#allocation4], 1
    %2219 = vsyncpa [#allocation7], 1
    %2220 = vsyncpa [#allocation10], 1
    %2221 = vsyncpa [#allocation5], 1

</llo_original>
